<compile_context>
chip_gen: v7x
topology: tpu7x:2x2x1
jax: 0.10.0
libtpu: 0.0.40
codegen_flags: <defaults>
</compile_context>

<pallas_src>
import functools

import numpy as np
import jax
import jax.numpy as jnp
from jax.experimental import pallas as pl
from jax.experimental.pallas import tpu as pltpu

MATMUL_DTYPE = jnp.bfloat16     # MXU operand dtype; accumulation stays f32


def _same_pad(K):
    """PyTorch padding='same' (stride=1, dilation=1): extra pad goes on the right."""
    pad_l = (K - 1) // 2
    return pad_l, (K - 1) - pad_l


# ----------------------------------------------------------------------------
# Fused Pallas kernel: whole encoder + decoder for one batch sample per grid step
# ----------------------------------------------------------------------------
def _make_kernel(enc_ks, dec_ks, pool, scale, relu_last_decoder):
    n_enc, n_dec = len(enc_ks), len(dec_ks)

    def _conv_same(h_f32, w_ref, b_ref, K):
        """Conv1d(padding='same') as ONE im2col MXU matmul.
        h_f32: (C_in, L) f32;  w_ref: (C_out, K*C_in) bf16;  b_ref: (C_out, 1) f32."""
        C, L = h_f32.shape
        pad_l, pad_r = _same_pad(K)
        h_lp = h_f32.astype(MATMUL_DTYPE)
        parts = []
        if pad_l:
            parts.append(jnp.zeros((C, pad_l), MATMUL_DTYPE))
        parts.append(h_lp)
        if pad_r:
            parts.append(jnp.zeros((C, pad_r), MATMUL_DTYPE))
        h_pad = jnp.concatenate(parts, axis=1) if len(parts) > 1 else h_lp
        # K shifted copies stacked along the channel (sublane) axis -> single matmul.
        cols = jnp.concatenate([h_pad[:, k:k + L] for k in range(K)], axis=0)   # (K*C, L)
        acc = jnp.dot(w_ref[...], cols, preferred_element_type=jnp.float32)     # (C_out, L)
        return acc + b_ref[...]                                                  # bias (f32)

    def kernel(*refs):
        it = iter(refs)
        x_ref = next(it)
        enc = [(next(it), next(it)) for _ in range(n_enc)]
        dec = [(next(it), next(it)) for _ in range(n_dec)]
        z_ref = next(it)
        o_ref = next(it)

        # -------- encoder: conv('same') -> ReLU -> maxpool(pool) -> dropout(0.0) --------
        h = x_ref[...].astype(jnp.float32)                            # (C0, L0)
        for K, (w_ref, b_ref) in zip(enc_ks, enc):
            acc = jnp.maximum(_conv_same(h, w_ref, b_ref, K), 0.0)    # conv + bias + ReLU
            C_out, L = acc.shape
            Lp = L // pool
            if Lp * pool != L:                                        # MaxPool1d floor semantics
                acc = acc[:, :Lp * pool]
            h = jnp.max(acc.reshape(C_out, Lp, pool), axis=-1)        # maxpool: no MXU, no selects
        z_ref[...] = h.astype(z_ref.dtype)                            # latent from f32 path

        # -------- decoder: upsample(linear) -> conv('same') -> ReLU (not on last) --------
        for i, (K, (w_ref, b_ref)) in enumerate(zip(dec_ks, dec)):
            C, L = h.shape
            # linear upsample x`scale`, align_corners=False: per-phase weighted clamped shifts
            left = jnp.concatenate([h[:, :1], h[:, :-1]], axis=1)     # h[l-1], edge-clamped
            right = jnp.concatenate([h[:, 1:], h[:, -1:]], axis=1)    # h[l+1], edge-clamped
            phases = []
            for p in range(scale):
                f = (p + 0.5) / scale - 0.5
                if f >= 0.0:
                    ph = (1.0 - f) * h + f * right
                else:
                    ph = (-f) * left + (1.0 + f) * h
                phases.append(ph[:, :, None])
            up = jnp.concatenate(phases, axis=2).reshape(C, L * scale)   # interleave phases
            acc = _conv_same(up, w_ref, b_ref, K)
            if i < n_dec - 1 or relu_last_decoder:
                acc = jnp.maximum(acc, 0.0)
            h = acc
        o_ref[...] = h.astype(o_ref.dtype)

    return kernel


# ----------------------------------------------------------------------------
# Wrapper: weight packing + single pallas_call with a parallel batch grid
# ----------------------------------------------------------------------------
@functools.partial(jax.jit, static_argnames=("pool", "scale"))
def conv_autoencoder_forward(x, enc_params, dec_params, *, pool=2, scale=2):
    B, C0, L0 = x.shape

    def pack_w(W):
        # (C_out, C_in, K) -> (C_out, K*C_in), matching im2col row order (k-major, c-minor)
        C_out, C_in, K = W.shape
        return jnp.transpose(W, (0, 2, 1)).reshape(C_out, K * C_in).astype(MATMUL_DTYPE)

    inputs = [x.astype(MATMUL_DTYPE)]
    in_specs = [pl.BlockSpec((None, C0, L0), lambda b: (b, 0, 0))]
    enc_ks, dec_ks = [], []

    def add_layer(W, b, ks):
        C_out, C_in, K = W.shape
        ks.append(K)
        w2 = pack_w(W)
        b2 = b.reshape(C_out, 1).astype(jnp.float32)
        inputs.extend([w2, b2])
        # grid-invariant blocks: stay resident in VMEM across all batch steps
        in_specs.extend([pl.BlockSpec(w2.shape, lambda _b: (0, 0)),
                         pl.BlockSpec(b2.shape, lambda _b: (0, 0))])
        return C_out

    # encoder shape walk
    L = L0
    Cz = C0
    for (W, b) in enc_params:
        Cz = add_layer(W, b, enc_ks)
        L = L // pool
    Lz = L
    # decoder shape walk
    C_last = Cz
    for (W, b) in dec_params:
        C_last = add_layer(W, b, dec_ks)
        L = L * scale
    L_last = L

    kernel = _make_kernel(tuple(enc_ks), tuple(dec_ks), pool, scale, relu_last_decoder=False)

    z, o = pl.pallas_call(
        kernel,
        grid=(B,),
        in_specs=in_specs,
        out_specs=(pl.BlockSpec((None, Cz, Lz), lambda b: (b, 0, 0)),
                   pl.BlockSpec((None, C_last, L_last), lambda b: (b, 0, 0))),
        out_shape=(jax.ShapeDtypeStruct((B, Cz, Lz), jnp.float32),
                   jax.ShapeDtypeStruct((B, C_last, L_last), jnp.float32)),
        compiler_params=pltpu.CompilerParams(
            dimension_semantics=("parallel",),          # both TCs on v7x; batch-disjoint outputs
            vmem_limit_bytes=48 * 1024 * 1024,          # <= v7x 64 MiB physical; ample v5e/v6e
        ),
    )(*inputs)

    merged_z = z.reshape(B, 1, Cz * Lz)                 # z.view(B, 1, -1)
    return merged_z, o


# ----------------------------------------------------------------------------
# Pure-JAX f32 reference (same inferred architecture) for correctness checking
# ----------------------------------------------------------------------------
def _linear_upsample_matrix_np(Lin, scale):
    """x @ M == F.interpolate(x, scale_factor=scale, mode='linear', align_corners=False)."""
    Lup = Lin * scale
    j = np.arange(Lup, dtype=np.float64)
    src = np.maximum((j + 0.5) / float(scale) - 0.5, 0.0)
    i0 = np.minimum(np.floor(src).astype(np.int64), Lin - 1)
    i1 = np.minimum(i0 + 1, Lin - 1)
    lam1 = src - i0
    M = np.zeros((Lin, Lup), np.float64)
    cols = np.arange(Lup)
    np.add.at(M, (i0, cols), 1.0 - lam1)
    np.add.at(M, (i1, cols), lam1)
    return M.astype(np.float32)


def reference_forward(x, enc_params, dec_params, *, pool=2, scale=2):
    def conv1d_same(h, W, b):
        C_out, C_in, K = W.shape
        pad_l, pad_r = _same_pad(K)
        hp = jnp.pad(h, ((0, 0), (0, 0), (pad_l, pad_r)))
        L = h.shape[-1]
        cols = jnp.stack([hp[:, :, k:k + L] for k in range(K)], axis=2)     # (B, C_in, K, L)
        return jnp.einsum('ock,bckl->bol', W, cols) + b[None, :, None]

    h = x
    for (W, b) in enc_params:
        h = jnp.maximum(conv1d_same(h, W, b), 0.0)
        Bsz, C, L = h.shape
        h = jnp.max(h[:, :, :(L // pool) * pool].reshape(Bsz, C, L // pool, pool), axis=-1)
    z = h
    for i, (W, b) in enumerate(dec_params):
        M = jnp.asarray(_linear_upsample_matrix_np(h.shape[-1], scale))
        h = conv1d_same(jnp.einsum('bcl,lm->bcm', h, M), W, b)
        if i < len(dec_params) - 1:
            h = jnp.maximum(h, 0.0)
    return z.reshape(z.shape[0], 1, -1), h


# ----------------------------------------------------------------------------
# Deterministic parameter init (PyTorch Conv1d default: U(-1/sqrt(fan_in), +))
# ----------------------------------------------------------------------------
def init_params(key, in_kern_out):
    def one_conv(k, cin, ksz, cout):
        k1, k2 = jax.random.split(k)
        bound = 1.0 / (cin * ksz) ** 0.5
        W = jax.random.uniform(k1, (cout, cin, ksz), jnp.float32, -bound, bound)
        b = jax.random.uniform(k2, (cout,), jnp.float32, -bound, bound)
        return W, b

    enc = []
    for (cin, ksz, cout) in in_kern_out:
        key, sub = jax.random.split(key)
        enc.append(one_conv(sub, cin, ksz, cout))

    dec_spec = [t[::-1] for t in in_kern_out[::-1]]          # mirrors the PyTorch module
    dec = []
    for (cin, ksz, cout) in dec_spec:
        key, sub = jax.random.split(key)
        dec.append(one_conv(sub, cin, ksz, cout))
    return enc, dec


if __name__ == "__main__":
    key = jax.random.PRNGKey(0)
    kx, kp = jax.random.split(key)

    in_kern_out = [(4, 3, 8), (8, 3, 16)]                    # (in_ch, kernel, out_ch) per layer
    B, C0, L0 = 2, 4, 16
    x = jax.random.normal(kx, (B, C0, L0), jnp.float32)      # NCL
    # feed both paths the same bf16-rounded input so the diff only measures kernel rounding
    x = x.astype(jnp.bfloat16).astype(jnp.float32)

    enc_params, dec_params = init_params(kp, in_kern_out)

    merged_z, o = conv_autoencoder_forward(x, enc_params, dec_params, pool=2, scale=2)
    merged_z, o = jax.block_until_ready((merged_z, o))

    # encoder halves length twice: 16 -> 8 -> 4 with 16 channels -> merged_z (B, 1, 64)
    assert merged_z.shape == (B, 1, 16 * (L0 // 4)), merged_z.shape
    assert o.shape == x.shape, o.shape
    assert bool(jnp.all(jnp.isfinite(merged_z))) and bool(jnp.all(jnp.isfinite(o)))

    ref_z, ref_o = reference_forward(x, enc_params, dec_params, pool=2, scale=2)
    err_z = float(jnp.max(jnp.abs(merged_z - ref_z)))
    err_o = float(jnp.max(jnp.abs(o - ref_o)))
    assert err_z < 5e-2 and err_o < 5e-2, (err_z, err_o)     # bf16-operand tolerance

    print("KERNEL_OK")
</pallas_src>

<mosaic_0001>
module attributes {stable_mosaic.version = 11 : i64} {
  func.func @kernel(%arg0: i32, %arg1: memref<1x4x16xbf16, #tpu.memory_space<vmem>>, %arg2: memref<8x12xbf16, #tpu.memory_space<vmem>>, %arg3: memref<8x1xf32, #tpu.memory_space<vmem>>, %arg4: memref<16x24xbf16, #tpu.memory_space<vmem>>, %arg5: memref<16x1xf32, #tpu.memory_space<vmem>>, %arg6: memref<8x48xbf16, #tpu.memory_space<vmem>>, %arg7: memref<8x1xf32, #tpu.memory_space<vmem>>, %arg8: memref<4x24xbf16, #tpu.memory_space<vmem>>, %arg9: memref<4x1xf32, #tpu.memory_space<vmem>>, %arg10: memref<1x16x4xf32, #tpu.memory_space<vmem>>, %arg11: memref<1x4x16xf32, #tpu.memory_space<vmem>>) attributes {dimension_semantics = [#tpu.dimension_semantics<parallel>], iteration_bounds = array<i64: 2>, scalar_prefetch = 0 : i64, scratch_operands = 0 : i64, tpu.core_type = #tpu.core_type<tc>, window_params = [{transform_indices = @transform_0, window_bounds = array<i64: 1, 4, 16>}, {pipeline_mode = #tpu.pipeline_mode<synchronous>, transform_indices = @transform_1, window_bounds = array<i64: 8, 12>}, {pipeline_mode = #tpu.pipeline_mode<synchronous>, transform_indices = @transform_2, window_bounds = array<i64: 8, 1>}, {pipeline_mode = #tpu.pipeline_mode<synchronous>, transform_indices = @transform_3, window_bounds = array<i64: 16, 24>}, {pipeline_mode = #tpu.pipeline_mode<synchronous>, transform_indices = @transform_4, window_bounds = array<i64: 16, 1>}, {pipeline_mode = #tpu.pipeline_mode<synchronous>, transform_indices = @transform_5, window_bounds = array<i64: 8, 48>}, {pipeline_mode = #tpu.pipeline_mode<synchronous>, transform_indices = @transform_6, window_bounds = array<i64: 8, 1>}, {pipeline_mode = #tpu.pipeline_mode<synchronous>, transform_indices = @transform_7, window_bounds = array<i64: 4, 24>}, {pipeline_mode = #tpu.pipeline_mode<synchronous>, transform_indices = @transform_8, window_bounds = array<i64: 4, 1>}, {transform_indices = @transform_9, window_bounds = array<i64: 1, 16, 4>}, {transform_indices = @transform_10, window_bounds = array<i64: 1, 4, 16>}]} {
    %c0 = arith.constant 0 : index
    %c0_0 = arith.constant 0 : index
    %c0_1 = arith.constant 0 : index
    %0 = vector.load %arg1[%c0, %c0_0, %c0_1] : memref<1x4x16xbf16, #tpu.memory_space<vmem>>, vector<1x4x16xbf16>
    %1 = vector.shape_cast %0 : vector<1x4x16xbf16> to vector<4x16xbf16>
    %2 = arith.extf %1 : vector<4x16xbf16> to vector<4x16xf32>
    %3 = arith.truncf %2 : vector<4x16xf32> to vector<4x16xbf16>
    %cst = arith.constant 0.000000e+00 : bf16
    %4 = vector.broadcast %cst : bf16 to vector<4x1xbf16>
    %cst_2 = arith.constant 0.000000e+00 : bf16
    %5 = vector.broadcast %cst_2 : bf16 to vector<4x1xbf16>
    %6 = tpu.concatenate %4, %3, %5 in 1 : vector<4x1xbf16>, vector<4x16xbf16>, vector<4x1xbf16> -> vector<4x18xbf16>
    %7 = vector.extract_strided_slice %6 {offsets = [0, 0], sizes = [4, 16], strides = [1, 1]} : vector<4x18xbf16> to vector<4x16xbf16>
    %8 = vector.extract_strided_slice %6 {offsets = [0, 1], sizes = [4, 16], strides = [1, 1]} : vector<4x18xbf16> to vector<4x16xbf16>
    %9 = vector.extract_strided_slice %6 {offsets = [0, 2], sizes = [4, 16], strides = [1, 1]} : vector<4x18xbf16> to vector<4x16xbf16>
    %10 = tpu.concatenate %7, %8, %9 in 0 : vector<4x16xbf16>, vector<4x16xbf16>, vector<4x16xbf16> -> vector<12x16xbf16>
    %c0_3 = arith.constant 0 : index
    %c0_4 = arith.constant 0 : index
    %11 = vector.load %arg2[%c0_3, %c0_4] : memref<8x12xbf16, #tpu.memory_space<vmem>>, vector<8x12xbf16>
    %cst_5 = arith.constant dense<0.000000e+00> : vector<8x16xf32>
    %12 = tpu.matmul %11, %10, %cst_5 {dimension_numbers = #tpu.dot_dimension_numbers<[1], [0], [0], [1], [0, 0, 1, 1], [], []>} : vector<8x12xbf16>, vector<12x16xbf16>, vector<8x16xf32> -> vector<8x16xf32>
    %c0_6 = arith.constant 0 : index
    %c0_7 = arith.constant 0 : index
    %13 = vector.load %arg3[%c0_6, %c0_7] : memref<8x1xf32, #tpu.memory_space<vmem>>, vector<8x1xf32>
    %14 = vector.broadcast %13 : vector<8x1xf32> to vector<8x16xf32>
    %15 = arith.addf %12, %14 : vector<8x16xf32>
    %cst_8 = arith.constant 0.000000e+00 : f32
    %16 = vector.broadcast %cst_8 : f32 to vector<8x16xf32>
    %17 = arith.maximumf %15, %16 : vector<8x16xf32>
    %18 = vector.shape_cast %17 : vector<8x16xf32> to vector<8x8x2xf32>
    %cst_9 = arith.constant dense<0xFF800000> : vector<8x8xf32>
    %19 = vector.multi_reduction <maximumf>, %18, %cst_9 [2] : vector<8x8x2xf32> to vector<8x8xf32>
    %20 = arith.truncf %19 : vector<8x8xf32> to vector<8x8xbf16>
    %cst_10 = arith.constant 0.000000e+00 : bf16
    %21 = vector.broadcast %cst_10 : bf16 to vector<8x1xbf16>
    %cst_11 = arith.constant 0.000000e+00 : bf16
    %22 = vector.broadcast %cst_11 : bf16 to vector<8x1xbf16>
    %23 = tpu.concatenate %21, %20, %22 in 1 : vector<8x1xbf16>, vector<8x8xbf16>, vector<8x1xbf16> -> vector<8x10xbf16>
    %24 = vector.extract_strided_slice %23 {offsets = [0, 0], sizes = [8, 8], strides = [1, 1]} : vector<8x10xbf16> to vector<8x8xbf16>
    %25 = vector.extract_strided_slice %23 {offsets = [0, 1], sizes = [8, 8], strides = [1, 1]} : vector<8x10xbf16> to vector<8x8xbf16>
    %26 = vector.extract_strided_slice %23 {offsets = [0, 2], sizes = [8, 8], strides = [1, 1]} : vector<8x10xbf16> to vector<8x8xbf16>
    %27 = tpu.concatenate %24, %25, %26 in 0 : vector<8x8xbf16>, vector<8x8xbf16>, vector<8x8xbf16> -> vector<24x8xbf16>
    %c0_12 = arith.constant 0 : index
    %c0_13 = arith.constant 0 : index
    %28 = vector.load %arg4[%c0_12, %c0_13] : memref<16x24xbf16, #tpu.memory_space<vmem>>, vector<16x24xbf16>
    %cst_14 = arith.constant dense<0.000000e+00> : vector<16x8xf32>
    %29 = tpu.matmul %28, %27, %cst_14 {dimension_numbers = #tpu.dot_dimension_numbers<[1], [0], [0], [1], [0, 0, 1, 1], [], []>} : vector<16x24xbf16>, vector<24x8xbf16>, vector<16x8xf32> -> vector<16x8xf32>
    %c0_15 = arith.constant 0 : index
    %c0_16 = arith.constant 0 : index
    %30 = vector.load %arg5[%c0_15, %c0_16] : memref<16x1xf32, #tpu.memory_space<vmem>>, vector<16x1xf32>
    %31 = vector.broadcast %30 : vector<16x1xf32> to vector<16x8xf32>
    %32 = arith.addf %29, %31 : vector<16x8xf32>
    %cst_17 = arith.constant 0.000000e+00 : f32
    %33 = vector.broadcast %cst_17 : f32 to vector<16x8xf32>
    %34 = arith.maximumf %32, %33 : vector<16x8xf32>
    %35 = vector.shape_cast %34 : vector<16x8xf32> to vector<16x4x2xf32>
    %cst_18 = arith.constant dense<0xFF800000> : vector<16x4xf32>
    %36 = vector.multi_reduction <maximumf>, %35, %cst_18 [2] : vector<16x4x2xf32> to vector<16x4xf32>
    %c0_19 = arith.constant 0 : index
    %c0_20 = arith.constant 0 : index
    %c0_21 = arith.constant 0 : index
    %37 = vector.load %arg10[%c0_19, %c0_20, %c0_21] : memref<1x16x4xf32, #tpu.memory_space<vmem>>, vector<1x16x4xf32>
    %38 = vector.shape_cast %37 : vector<1x16x4xf32> to vector<16x4xf32>
    %39 = vector.shape_cast %36 : vector<16x4xf32> to vector<1x16x4xf32>
    tpu.vector_store %arg10[%c0_19, %c0_20, %c0_21], %39 {strides = array<i32>} : memref<1x16x4xf32, #tpu.memory_space<vmem>>, vector<1x16x4xf32>,
    %40 = vector.extract_strided_slice %36 {offsets = [0, 0], sizes = [16, 1], strides = [1, 1]} : vector<16x4xf32> to vector<16x1xf32>
    %41 = vector.extract_strided_slice %36 {offsets = [0, 0], sizes = [16, 3], strides = [1, 1]} : vector<16x4xf32> to vector<16x3xf32>
    %42 = tpu.concatenate %40, %41 in 1 : vector<16x1xf32>, vector<16x3xf32> -> vector<16x4xf32>
    %43 = vector.extract_strided_slice %36 {offsets = [0, 1], sizes = [16, 3], strides = [1, 1]} : vector<16x4xf32> to vector<16x3xf32>
    %44 = vector.extract_strided_slice %36 {offsets = [0, 3], sizes = [16, 1], strides = [1, 1]} : vector<16x4xf32> to vector<16x1xf32>
    %45 = tpu.concatenate %43, %44 in 1 : vector<16x3xf32>, vector<16x1xf32> -> vector<16x4xf32>
    %cst_22 = arith.constant 2.500000e-01 : f32
    %46 = vector.broadcast %cst_22 : f32 to vector<16x4xf32>
    %47 = arith.mulf %46, %42 : vector<16x4xf32>
    %cst_23 = arith.constant 7.500000e-01 : f32
    %48 = vector.broadcast %cst_23 : f32 to vector<16x4xf32>
    %49 = arith.mulf %48, %36 : vector<16x4xf32>
    %50 = arith.addf %47, %49 : vector<16x4xf32>
    %51 = vector.shape_cast %50 : vector<16x4xf32> to vector<16x4x1xf32>
    %cst_24 = arith.constant 7.500000e-01 : f32
    %52 = vector.broadcast %cst_24 : f32 to vector<16x4xf32>
    %53 = arith.mulf %52, %36 : vector<16x4xf32>
    %cst_25 = arith.constant 2.500000e-01 : f32
    %54 = vector.broadcast %cst_25 : f32 to vector<16x4xf32>
    %55 = arith.mulf %54, %45 : vector<16x4xf32>
    %56 = arith.addf %53, %55 : vector<16x4xf32>
    %57 = vector.shape_cast %56 : vector<16x4xf32> to vector<16x4x1xf32>
    %58 = tpu.concatenate %51, %57 in 2 : vector<16x4x1xf32>, vector<16x4x1xf32> -> vector<16x4x2xf32>
    %59 = vector.shape_cast %58 : vector<16x4x2xf32> to vector<16x8xf32>
    %60 = arith.truncf %59 : vector<16x8xf32> to vector<16x8xbf16>
    %cst_26 = arith.constant 0.000000e+00 : bf16
    %61 = vector.broadcast %cst_26 : bf16 to vector<16x1xbf16>
    %cst_27 = arith.constant 0.000000e+00 : bf16
    %62 = vector.broadcast %cst_27 : bf16 to vector<16x1xbf16>
    %63 = tpu.concatenate %61, %60, %62 in 1 : vector<16x1xbf16>, vector<16x8xbf16>, vector<16x1xbf16> -> vector<16x10xbf16>
    %64 = vector.extract_strided_slice %63 {offsets = [0, 0], sizes = [16, 8], strides = [1, 1]} : vector<16x10xbf16> to vector<16x8xbf16>
    %65 = vector.extract_strided_slice %63 {offsets = [0, 1], sizes = [16, 8], strides = [1, 1]} : vector<16x10xbf16> to vector<16x8xbf16>
    %66 = vector.extract_strided_slice %63 {offsets = [0, 2], sizes = [16, 8], strides = [1, 1]} : vector<16x10xbf16> to vector<16x8xbf16>
    %67 = tpu.concatenate %64, %65, %66 in 0 : vector<16x8xbf16>, vector<16x8xbf16>, vector<16x8xbf16> -> vector<48x8xbf16>
    %c0_28 = arith.constant 0 : index
    %c0_29 = arith.constant 0 : index
    %68 = vector.load %arg6[%c0_28, %c0_29] : memref<8x48xbf16, #tpu.memory_space<vmem>>, vector<8x48xbf16>
    %cst_30 = arith.constant dense<0.000000e+00> : vector<8x8xf32>
    %69 = tpu.matmul %68, %67, %cst_30 {dimension_numbers = #tpu.dot_dimension_numbers<[1], [0], [0], [1], [0, 0, 1, 1], [], []>} : vector<8x48xbf16>, vector<48x8xbf16>, vector<8x8xf32> -> vector<8x8xf32>
    %c0_31 = arith.constant 0 : index
    %c0_32 = arith.constant 0 : index
    %70 = vector.load %arg7[%c0_31, %c0_32] : memref<8x1xf32, #tpu.memory_space<vmem>>, vector<8x1xf32>
    %71 = vector.broadcast %70 : vector<8x1xf32> to vector<8x8xf32>
    %72 = arith.addf %69, %71 : vector<8x8xf32>
    %cst_33 = arith.constant 0.000000e+00 : f32
    %73 = vector.broadcast %cst_33 : f32 to vector<8x8xf32>
    %74 = arith.maximumf %72, %73 : vector<8x8xf32>
    %75 = vector.extract_strided_slice %74 {offsets = [0, 0], sizes = [8, 1], strides = [1, 1]} : vector<8x8xf32> to vector<8x1xf32>
    %76 = vector.extract_strided_slice %74 {offsets = [0, 0], sizes = [8, 7], strides = [1, 1]} : vector<8x8xf32> to vector<8x7xf32>
    %77 = tpu.concatenate %75, %76 in 1 : vector<8x1xf32>, vector<8x7xf32> -> vector<8x8xf32>
    %78 = vector.extract_strided_slice %74 {offsets = [0, 1], sizes = [8, 7], strides = [1, 1]} : vector<8x8xf32> to vector<8x7xf32>
    %79 = vector.extract_strided_slice %74 {offsets = [0, 7], sizes = [8, 1], strides = [1, 1]} : vector<8x8xf32> to vector<8x1xf32>
    %80 = tpu.concatenate %78, %79 in 1 : vector<8x7xf32>, vector<8x1xf32> -> vector<8x8xf32>
    %cst_34 = arith.constant 2.500000e-01 : f32
    %81 = vector.broadcast %cst_34 : f32 to vector<8x8xf32>
    %82 = arith.mulf %81, %77 : vector<8x8xf32>
    %cst_35 = arith.constant 7.500000e-01 : f32
    %83 = vector.broadcast %cst_35 : f32 to vector<8x8xf32>
    %84 = arith.mulf %83, %74 : vector<8x8xf32>
    %85 = arith.addf %82, %84 : vector<8x8xf32>
    %86 = vector.shape_cast %85 : vector<8x8xf32> to vector<8x8x1xf32>
    %cst_36 = arith.constant 7.500000e-01 : f32
    %87 = vector.broadcast %cst_36 : f32 to vector<8x8xf32>
    %88 = arith.mulf %87, %74 : vector<8x8xf32>
    %cst_37 = arith.constant 2.500000e-01 : f32
    %89 = vector.broadcast %cst_37 : f32 to vector<8x8xf32>
    %90 = arith.mulf %89, %80 : vector<8x8xf32>
    %91 = arith.addf %88, %90 : vector<8x8xf32>
    %92 = vector.shape_cast %91 : vector<8x8xf32> to vector<8x8x1xf32>
    %93 = tpu.concatenate %86, %92 in 2 : vector<8x8x1xf32>, vector<8x8x1xf32> -> vector<8x8x2xf32>
    %94 = vector.shape_cast %93 : vector<8x8x2xf32> to vector<8x16xf32>
    %95 = arith.truncf %94 : vector<8x16xf32> to vector<8x16xbf16>
    %cst_38 = arith.constant 0.000000e+00 : bf16
    %96 = vector.broadcast %cst_38 : bf16 to vector<8x1xbf16>
    %cst_39 = arith.constant 0.000000e+00 : bf16
    %97 = vector.broadcast %cst_39 : bf16 to vector<8x1xbf16>
    %98 = tpu.concatenate %96, %95, %97 in 1 : vector<8x1xbf16>, vector<8x16xbf16>, vector<8x1xbf16> -> vector<8x18xbf16>
    %99 = vector.extract_strided_slice %98 {offsets = [0, 0], sizes = [8, 16], strides = [1, 1]} : vector<8x18xbf16> to vector<8x16xbf16>
    %100 = vector.extract_strided_slice %98 {offsets = [0, 1], sizes = [8, 16], strides = [1, 1]} : vector<8x18xbf16> to vector<8x16xbf16>
    %101 = vector.extract_strided_slice %98 {offsets = [0, 2], sizes = [8, 16], strides = [1, 1]} : vector<8x18xbf16> to vector<8x16xbf16>
    %102 = tpu.concatenate %99, %100, %101 in 0 : vector<8x16xbf16>, vector<8x16xbf16>, vector<8x16xbf16> -> vector<24x16xbf16>
    %c0_40 = arith.constant 0 : index
    %c0_41 = arith.constant 0 : index
    %103 = vector.load %arg8[%c0_40, %c0_41] : memref<4x24xbf16, #tpu.memory_space<vmem>>, vector<4x24xbf16>
    %cst_42 = arith.constant dense<0.000000e+00> : vector<4x16xf32>
    %104 = tpu.matmul %103, %102, %cst_42 {dimension_numbers = #tpu.dot_dimension_numbers<[1], [0], [0], [1], [0, 0, 1, 1], [], []>} : vector<4x24xbf16>, vector<24x16xbf16>, vector<4x16xf32> -> vector<4x16xf32>
    %c0_43 = arith.constant 0 : index
    %c0_44 = arith.constant 0 : index
    %105 = vector.load %arg9[%c0_43, %c0_44] : memref<4x1xf32, #tpu.memory_space<vmem>>, vector<4x1xf32>
    %106 = vector.broadcast %105 : vector<4x1xf32> to vector<4x16xf32>
    %107 = arith.addf %104, %106 : vector<4x16xf32>
    %c0_45 = arith.constant 0 : index
    %c0_46 = arith.constant 0 : index
    %c0_47 = arith.constant 0 : index
    %108 = vector.load %arg11[%c0_45, %c0_46, %c0_47] : memref<1x4x16xf32, #tpu.memory_space<vmem>>, vector<1x4x16xf32>
    %109 = vector.shape_cast %108 : vector<1x4x16xf32> to vector<4x16xf32>
    %110 = vector.shape_cast %107 : vector<4x16xf32> to vector<1x4x16xf32>
    tpu.vector_store %arg11[%c0_45, %c0_46, %c0_47], %110 {strides = array<i32>} : memref<1x4x16xf32, #tpu.memory_space<vmem>>, vector<1x4x16xf32>,
    return
  }
  func.func @transform_0(%arg0: i32) -> (i32, i32, i32) {
    %c0_i32 = arith.constant 0 : i32
    %c0_i32_0 = arith.constant 0 : i32
    %c0_i32_1 = arith.constant 0 : i32
    return %arg0, %c0_i32, %c0_i32_0 : i32, i32, i32
  }
  func.func @transform_1(%arg0: i32) -> (i32, i32) {
    %c0_i32 = arith.constant 0 : i32
    %c0_i32_0 = arith.constant 0 : i32
    %c0_i32_1 = arith.constant 0 : i32
    return %c0_i32, %c0_i32_0 : i32, i32
  }
  func.func @transform_2(%arg0: i32) -> (i32, i32) {
    %c0_i32 = arith.constant 0 : i32
    %c0_i32_0 = arith.constant 0 : i32
    %c0_i32_1 = arith.constant 0 : i32
    return %c0_i32, %c0_i32_0 : i32, i32
  }
  func.func @transform_3(%arg0: i32) -> (i32, i32) {
    %c0_i32 = arith.constant 0 : i32
    %c0_i32_0 = arith.constant 0 : i32
    %c0_i32_1 = arith.constant 0 : i32
    return %c0_i32, %c0_i32_0 : i32, i32
  }
  func.func @transform_4(%arg0: i32) -> (i32, i32) {
    %c0_i32 = arith.constant 0 : i32
    %c0_i32_0 = arith.constant 0 : i32
    %c0_i32_1 = arith.constant 0 : i32
    return %c0_i32, %c0_i32_0 : i32, i32
  }
  func.func @transform_5(%arg0: i32) -> (i32, i32) {
    %c0_i32 = arith.constant 0 : i32
    %c0_i32_0 = arith.constant 0 : i32
    %c0_i32_1 = arith.constant 0 : i32
    return %c0_i32, %c0_i32_0 : i32, i32
  }
  func.func @transform_6(%arg0: i32) -> (i32, i32) {
    %c0_i32 = arith.constant 0 : i32
    %c0_i32_0 = arith.constant 0 : i32
    %c0_i32_1 = arith.constant 0 : i32
    return %c0_i32, %c0_i32_0 : i32, i32
  }
  func.func @transform_7(%arg0: i32) -> (i32, i32) {
    %c0_i32 = arith.constant 0 : i32
    %c0_i32_0 = arith.constant 0 : i32
    %c0_i32_1 = arith.constant 0 : i32
    return %c0_i32, %c0_i32_0 : i32, i32
  }
  func.func @transform_8(%arg0: i32) -> (i32, i32) {
    %c0_i32 = arith.constant 0 : i32
    %c0_i32_0 = arith.constant 0 : i32
    %c0_i32_1 = arith.constant 0 : i32
    return %c0_i32, %c0_i32_0 : i32, i32
  }
  func.func @transform_9(%arg0: i32) -> (i32, i32, i32) {
    %c0_i32 = arith.constant 0 : i32
    %c0_i32_0 = arith.constant 0 : i32
    %c0_i32_1 = arith.constant 0 : i32
    return %arg0, %c0_i32, %c0_i32_0 : i32, i32, i32
  }
  func.func @transform_10(%arg0: i32) -> (i32, i32, i32) {
    %c0_i32 = arith.constant 0 : i32
    %c0_i32_0 = arith.constant 0 : i32
    %c0_i32_1 = arith.constant 0 : i32
    return %arg0, %c0_i32, %c0_i32_0 : i32, i32, i32
  }
}

</mosaic_0001>

<llo_original>
// kernel: conv_autoencoder_forward.1
$region0: #{conv_autoencoder_forward.1}
  #allocation0 [shape = 'u32[]', space=smem, size = 0x4, offset = 0x4, fixed_abs, tag = 'smem constant byte address 0x4 - core index']
  #allocation1 [shape = 'u32[144,128]{1,0:T(1,128)}', space=vmem, size = 0x12000, scoped, tag = 'internal scratch']
  %s0 = inlined_call_operand.vmem [shape: bf16[2,4,16], index: 0, kind: input, shape index: {}]
  %s1 = inlined_call_operand.vmem [shape: bf16[8,12], index: 1, kind: input, shape index: {}]
  %s2 = inlined_call_operand.vmem [shape: f32[8,1], index: 2, kind: input, shape index: {}]
  %s3 = inlined_call_operand.vmem [shape: bf16[16,24], index: 3, kind: input, shape index: {}]
  %s4 = inlined_call_operand.vmem [shape: f32[16,1], index: 4, kind: input, shape index: {}]
  %s5 = inlined_call_operand.vmem [shape: bf16[8,48], index: 5, kind: input, shape index: {}]
  %s6 = inlined_call_operand.vmem [shape: f32[8,1], index: 6, kind: input, shape index: {}]
  %s7 = inlined_call_operand.vmem [shape: bf16[4,24], index: 7, kind: input, shape index: {}]
  %s8 = inlined_call_operand.vmem [shape: f32[4,1], index: 8, kind: input, shape index: {}]
  %s9 = inlined_call_operand.vmem [shape: f32[2,16,4], index: 9, kind: output, shape index: {0}]
  %s10 = inlined_call_operand.hbm [shape: f32[2,4,16], index: 10, kind: output, shape index: {1}]
  %11 = xla_tuple %s9, %s10
  %s12 = sld [smem:[#allocation0]]
  $region77: #{conv_autoencoder_forward.1} parent=0
    _
  %s14 = ssub.s32 1, %s12
  %s15 = scalar_select 0, %s14, %s12
  $region1: #{conv_autoencoder_forward.1} parent=0
    #allocation2 [shape = 'u8[4096]{0}', space=vmem, size = 0x1000, scoped, tag = 'output window, operand 1']
    #allocation3 [shape = 's32[2]{0}', space=sflag, size = 0x8, scoped, tag = 'scoped memory for conv_autoencoder_forward.1']
    %16 = vsyncpa [#allocation3], 0
    %s17 = scalar_lea.sflag [#allocation3], 1
    %18 = vsyncpa %s17, 0
    loop: start=0, step=1, limit=4
    $region2: #{conv_autoencoder_forward.1} parent=1 // loop_pre_header
      _
    $region3: #{conv_autoencoder_forward.1} parent=1 // loop_header
      %s20 = sphi 0, %s24
      %p21 = scmp.ge.s32.totalorder %s20, 4
      %s30 = sphi 0, %s32
      %s33 = sphi 0, %s30
      %s34 = sphi 0, %s33
      %s50 = sphi 0, %s34
      %s54 = sphi 0, %s54
      %s56 = sphi 0, %s54
      %s57 = sphi 0, %s56
      %s71 = sphi 0, %s57
      %s75 = sphi 0, %s75
      %s77 = sphi 0, %s75
      %s78 = sphi 0, %s77
      %s92 = sphi 0, %s78
      %s96 = sphi 0, %s96
      %s98 = sphi 0, %s96
      %s99 = sphi 0, %s98
      %s113 = sphi 0, %s99
      %s117 = sphi 0, %s117
      %s119 = sphi 0, %s117
      %s120 = sphi 0, %s119
      %s134 = sphi 0, %s120
      %s138 = sphi 0, %s138
      %s140 = sphi 0, %s138
      %s141 = sphi 0, %s140
      %s155 = sphi 0, %s141
      %s159 = sphi 0, %s159
      %s161 = sphi 0, %s159
      %s162 = sphi 0, %s161
      %s176 = sphi 0, %s162
      %s180 = sphi 0, %s180
      %s182 = sphi 0, %s180
      %s183 = sphi 0, %s182
      %s197 = sphi 0, %s183
      %s201 = sphi 0, %s201
      %s203 = sphi 0, %s201
      %s204 = sphi 0, %s203
      %s218 = sphi 0, %s204
      %s224 = sphi 0, %s226
      %s227 = sphi 0, %s224
      %s228 = sphi 0, %s227
      %s244 = sphi 0, %s228
      %s250 = sphi 0, %s252
      %s253 = sphi 0, %s250
      %s254 = sphi 0, %s253
      %s270 = sphi 0, %s254
    $region4: #{conv_autoencoder_forward.1} parent=1 // loop_header_branch
      %23 = sbr.rel (%p21) target = $region8
    $region5: #{conv_autoencoder_forward.1} parent=1 // loop_body
      %s25 = ssub.s32 %s20, 1
      %s26 = ssub.s32 %s20, 2
      %s27 = sadd.s32 %s20, 1
      %s28 = ssub.s32 %s20, %s27
      %p29 = scmp.eq.s32.totalorder %s28, 0
      %s31 = sadd.s32 %s30, 1
      %s32 = scalar_select %p29, %s30, %s31
      %p35 = pneg %p29
      %p36 = scmp.eq.s32.totalorder %s20, 1
      %p37 = por %p35, %p36
      %p38 = scmp.ne.s32.totalorder %s30, %s33
      %p39 = scmp.eq.s32.totalorder %s20, 0
      %p40 = por %p38, %p39
      %p41 = scmp.ne.s32.totalorder %s30, %s33
      %p42 = scmp.eq.s32.totalorder %s25, 1
      %p43 = por %p41, %p42
      %p44 = scmp.ne.s32.totalorder %s33, %s34
      %p45 = scmp.eq.s32.totalorder %s25, 0
      %p46 = por %p44, %p45
      %p47 = scmp.ne.s32.totalorder %s33, %s34
      %p48 = scmp.eq.s32.totalorder %s26, 1
      %p49 = por %p47, %p48
      %p51 = scmp.ne.s32.totalorder %s34, %s50
      %p52 = scmp.eq.s32.totalorder %s26, 0
      %p53 = por %p51, %p52
      %s55 = sadd.s32 %s54, 1
      %p58 = scmp.eq.s32.totalorder %s20, 1
      %p59 = scmp.ne.s32.totalorder %s54, %s56
      %p60 = scmp.eq.s32.totalorder %s20, 0
      %p61 = por %p59, %p60
      %p62 = scmp.ne.s32.totalorder %s54, %s56
      %p63 = scmp.eq.s32.totalorder %s25, 1
      %p64 = por %p62, %p63
      %p65 = scmp.ne.s32.totalorder %s56, %s57
      %p66 = scmp.eq.s32.totalorder %s25, 0
      %p67 = por %p65, %p66
      %p68 = scmp.ne.s32.totalorder %s56, %s57
      %p69 = scmp.eq.s32.totalorder %s26, 1
      %p70 = por %p68, %p69
      %p72 = scmp.ne.s32.totalorder %s57, %s71
      %p73 = scmp.eq.s32.totalorder %s26, 0
      %p74 = por %p72, %p73
      %s76 = sadd.s32 %s75, 1
      %p79 = scmp.eq.s32.totalorder %s20, 1
      %p80 = scmp.ne.s32.totalorder %s75, %s77
      %p81 = scmp.eq.s32.totalorder %s20, 0
      %p82 = por %p80, %p81
      %p83 = scmp.ne.s32.totalorder %s75, %s77
      %p84 = scmp.eq.s32.totalorder %s25, 1
      %p85 = por %p83, %p84
      %p86 = scmp.ne.s32.totalorder %s77, %s78
      %p87 = scmp.eq.s32.totalorder %s25, 0
      %p88 = por %p86, %p87
      %p89 = scmp.ne.s32.totalorder %s77, %s78
      %p90 = scmp.eq.s32.totalorder %s26, 1
      %p91 = por %p89, %p90
      %p93 = scmp.ne.s32.totalorder %s78, %s92
      %p94 = scmp.eq.s32.totalorder %s26, 0
      %p95 = por %p93, %p94
      %s97 = sadd.s32 %s96, 1
      %p100 = scmp.eq.s32.totalorder %s20, 1
      %p101 = scmp.ne.s32.totalorder %s96, %s98
      %p102 = scmp.eq.s32.totalorder %s20, 0
      %p103 = por %p101, %p102
      %p104 = scmp.ne.s32.totalorder %s96, %s98
      %p105 = scmp.eq.s32.totalorder %s25, 1
      %p106 = por %p104, %p105
      %p107 = scmp.ne.s32.totalorder %s98, %s99
      %p108 = scmp.eq.s32.totalorder %s25, 0
      %p109 = por %p107, %p108
      %p110 = scmp.ne.s32.totalorder %s98, %s99
      %p111 = scmp.eq.s32.totalorder %s26, 1
      %p112 = por %p110, %p111
      %p114 = scmp.ne.s32.totalorder %s99, %s113
      %p115 = scmp.eq.s32.totalorder %s26, 0
      %p116 = por %p114, %p115
      %s118 = sadd.s32 %s117, 1
      %p121 = scmp.eq.s32.totalorder %s20, 1
      %p122 = scmp.ne.s32.totalorder %s117, %s119
      %p123 = scmp.eq.s32.totalorder %s20, 0
      %p124 = por %p122, %p123
      %p125 = scmp.ne.s32.totalorder %s117, %s119
      %p126 = scmp.eq.s32.totalorder %s25, 1
      %p127 = por %p125, %p126
      %p128 = scmp.ne.s32.totalorder %s119, %s120
      %p129 = scmp.eq.s32.totalorder %s25, 0
      %p130 = por %p128, %p129
      %p131 = scmp.ne.s32.totalorder %s119, %s120
      %p132 = scmp.eq.s32.totalorder %s26, 1
      %p133 = por %p131, %p132
      %p135 = scmp.ne.s32.totalorder %s120, %s134
      %p136 = scmp.eq.s32.totalorder %s26, 0
      %p137 = por %p135, %p136
      %s139 = sadd.s32 %s138, 1
      %p142 = scmp.eq.s32.totalorder %s20, 1
      %p143 = scmp.ne.s32.totalorder %s138, %s140
      %p144 = scmp.eq.s32.totalorder %s20, 0
      %p145 = por %p143, %p144
      %p146 = scmp.ne.s32.totalorder %s138, %s140
      %p147 = scmp.eq.s32.totalorder %s25, 1
      %p148 = por %p146, %p147
      %p149 = scmp.ne.s32.totalorder %s140, %s141
      %p150 = scmp.eq.s32.totalorder %s25, 0
      %p151 = por %p149, %p150
      %p152 = scmp.ne.s32.totalorder %s140, %s141
      %p153 = scmp.eq.s32.totalorder %s26, 1
      %p154 = por %p152, %p153
      %p156 = scmp.ne.s32.totalorder %s141, %s155
      %p157 = scmp.eq.s32.totalorder %s26, 0
      %p158 = por %p156, %p157
      %s160 = sadd.s32 %s159, 1
      %p163 = scmp.eq.s32.totalorder %s20, 1
      %p164 = scmp.ne.s32.totalorder %s159, %s161
      %p165 = scmp.eq.s32.totalorder %s20, 0
      %p166 = por %p164, %p165
      %p167 = scmp.ne.s32.totalorder %s159, %s161
      %p168 = scmp.eq.s32.totalorder %s25, 1
      %p169 = por %p167, %p168
      %p170 = scmp.ne.s32.totalorder %s161, %s162
      %p171 = scmp.eq.s32.totalorder %s25, 0
      %p172 = por %p170, %p171
      %p173 = scmp.ne.s32.totalorder %s161, %s162
      %p174 = scmp.eq.s32.totalorder %s26, 1
      %p175 = por %p173, %p174
      %p177 = scmp.ne.s32.totalorder %s162, %s176
      %p178 = scmp.eq.s32.totalorder %s26, 0
      %p179 = por %p177, %p178
      %s181 = sadd.s32 %s180, 1
      %p184 = scmp.eq.s32.totalorder %s20, 1
      %p185 = scmp.ne.s32.totalorder %s180, %s182
      %p186 = scmp.eq.s32.totalorder %s20, 0
      %p187 = por %p185, %p186
      %p188 = scmp.ne.s32.totalorder %s180, %s182
      %p189 = scmp.eq.s32.totalorder %s25, 1
      %p190 = por %p188, %p189
      %p191 = scmp.ne.s32.totalorder %s182, %s183
      %p192 = scmp.eq.s32.totalorder %s25, 0
      %p193 = por %p191, %p192
      %p194 = scmp.ne.s32.totalorder %s182, %s183
      %p195 = scmp.eq.s32.totalorder %s26, 1
      %p196 = por %p194, %p195
      %p198 = scmp.ne.s32.totalorder %s183, %s197
      %p199 = scmp.eq.s32.totalorder %s26, 0
      %p200 = por %p198, %p199
      %s202 = sadd.s32 %s201, 1
      %p205 = scmp.eq.s32.totalorder %s20, 1
      %p206 = scmp.ne.s32.totalorder %s201, %s203
      %p207 = scmp.eq.s32.totalorder %s20, 0
      %p208 = por %p206, %p207
      %p209 = scmp.ne.s32.totalorder %s201, %s203
      %p210 = scmp.eq.s32.totalorder %s25, 1
      %p211 = por %p209, %p210
      %p212 = scmp.ne.s32.totalorder %s203, %s204
      %p213 = scmp.eq.s32.totalorder %s25, 0
      %p214 = por %p212, %p213
      %p215 = scmp.ne.s32.totalorder %s203, %s204
      %p216 = scmp.eq.s32.totalorder %s26, 1
      %p217 = por %p215, %p216
      %p219 = scmp.ne.s32.totalorder %s204, %s218
      %p220 = scmp.eq.s32.totalorder %s26, 0
      %p221 = por %p219, %p220
      %s222 = ssub.s32 %s20, %s27
      %p223 = scmp.eq.s32.totalorder %s222, 0
      %s225 = sadd.s32 %s224, 1
      %s226 = scalar_select %p223, %s224, %s225
      %p229 = pneg %p223
      %p230 = scmp.eq.s32.totalorder %s20, 1
      %p231 = por %p229, %p230
      %p232 = scmp.ne.s32.totalorder %s224, %s227
      %p233 = scmp.eq.s32.totalorder %s20, 0
      %p234 = por %p232, %p233
      %p235 = scmp.ne.s32.totalorder %s224, %s227
      %p236 = scmp.eq.s32.totalorder %s25, 1
      %p237 = por %p235, %p236
      %p238 = scmp.ne.s32.totalorder %s227, %s228
      %p239 = scmp.eq.s32.totalorder %s25, 0
      %p240 = por %p238, %p239
      %p241 = scmp.ne.s32.totalorder %s227, %s228
      %p242 = scmp.eq.s32.totalorder %s26, 1
      %p243 = por %p241, %p242
      %p245 = scmp.ne.s32.totalorder %s228, %s244
      %p246 = scmp.eq.s32.totalorder %s26, 0
      %p247 = por %p245, %p246
      %s248 = ssub.s32 %s20, %s27
      %p249 = scmp.eq.s32.totalorder %s248, 0
      %s251 = sadd.s32 %s250, 1
      %s252 = scalar_select %p249, %s250, %s251
      %p255 = pneg %p249
      %p256 = scmp.eq.s32.totalorder %s20, 1
      %p257 = por %p255, %p256
      %p258 = scmp.ne.s32.totalorder %s250, %s253
      %p259 = scmp.eq.s32.totalorder %s20, 0
      %p260 = por %p258, %p259
      %p261 = scmp.ne.s32.totalorder %s250, %s253
      %p262 = scmp.eq.s32.totalorder %s25, 1
      %p263 = por %p261, %p262
      %p264 = scmp.ne.s32.totalorder %s253, %s254
      %p265 = scmp.eq.s32.totalorder %s25, 0
      %p266 = por %p264, %p265
      %p267 = scmp.ne.s32.totalorder %s253, %s254
      %p268 = scmp.eq.s32.totalorder %s26, 1
      %p269 = por %p267, %p268
      %p271 = scmp.ne.s32.totalorder %s254, %s270
      %p272 = scmp.eq.s32.totalorder %s26, 0
      %p273 = por %p271, %p272
      %p274 = scmp.le.s32.totalorder 1, %s20
      %p275 = scmp.lt.s32.totalorder %s20, 3
      %p276 = pnand %p274, %p275
      %p277 = pneg %p276
      // Predicated region
      $region9: #{conv_autoencoder_forward.1} parent=5 // pred_check
        _
      $region10: #{conv_autoencoder_forward.1} parent=5 // pred_check_branch
        %279 = sbr.rel (%p276) target = $region12
      $region11: #{conv_autoencoder_forward.1} parent=5 // pred_region
        %s280 = ssub.s32 %s20, 1
        // Predicated region
        $region13: #{conv_autoencoder_forward.1} parent=11 // pred_check
          %p281 = pneg %p67
        $region14: #{conv_autoencoder_forward.1} parent=11 // pred_check_branch
          %283 = sbr.rel (%p281) target = $region16
        $region15: #{conv_autoencoder_forward.1} parent=11 // pred_region
          _
        $region16: #{conv_autoencoder_forward.1} parent=11 // pred_fallthru
          _
        // Predicated region
        $region17: #{conv_autoencoder_forward.1} parent=11 // pred_check
          %p284 = pneg %p88
        $region18: #{conv_autoencoder_forward.1} parent=11 // pred_check_branch
          %286 = sbr.rel (%p284) target = $region20
        $region19: #{conv_autoencoder_forward.1} parent=11 // pred_region
          _
        $region20: #{conv_autoencoder_forward.1} parent=11 // pred_fallthru
          _
        // Predicated region
        $region21: #{conv_autoencoder_forward.1} parent=11 // pred_check
          %p287 = pneg %p109
        $region22: #{conv_autoencoder_forward.1} parent=11 // pred_check_branch
          %289 = sbr.rel (%p287) target = $region24
        $region23: #{conv_autoencoder_forward.1} parent=11 // pred_region
          _
        $region24: #{conv_autoencoder_forward.1} parent=11 // pred_fallthru
          _
        // Predicated region
        $region25: #{conv_autoencoder_forward.1} parent=11 // pred_check
          %p290 = pneg %p130
        $region26: #{conv_autoencoder_forward.1} parent=11 // pred_check_branch
          %292 = sbr.rel (%p290) target = $region28
        $region27: #{conv_autoencoder_forward.1} parent=11 // pred_region
          _
        $region28: #{conv_autoencoder_forward.1} parent=11 // pred_fallthru
          _
        // Predicated region
        $region29: #{conv_autoencoder_forward.1} parent=11 // pred_check
          %p293 = pneg %p151
        $region30: #{conv_autoencoder_forward.1} parent=11 // pred_check_branch
          %295 = sbr.rel (%p293) target = $region32
        $region31: #{conv_autoencoder_forward.1} parent=11 // pred_region
          _
        $region32: #{conv_autoencoder_forward.1} parent=11 // pred_fallthru
          _
        // Predicated region
        $region33: #{conv_autoencoder_forward.1} parent=11 // pred_check
          %p296 = pneg %p172
        $region34: #{conv_autoencoder_forward.1} parent=11 // pred_check_branch
          %298 = sbr.rel (%p296) target = $region36
        $region35: #{conv_autoencoder_forward.1} parent=11 // pred_region
          _
        $region36: #{conv_autoencoder_forward.1} parent=11 // pred_fallthru
          _
        // Predicated region
        $region37: #{conv_autoencoder_forward.1} parent=11 // pred_check
          %p299 = pneg %p193
        $region38: #{conv_autoencoder_forward.1} parent=11 // pred_check_branch
          %301 = sbr.rel (%p299) target = $region40
        $region39: #{conv_autoencoder_forward.1} parent=11 // pred_region
          _
        $region40: #{conv_autoencoder_forward.1} parent=11 // pred_fallthru
          _
        // Predicated region
        $region41: #{conv_autoencoder_forward.1} parent=11 // pred_check
          %p302 = pneg %p214
        $region42: #{conv_autoencoder_forward.1} parent=11 // pred_check_branch
          %304 = sbr.rel (%p302) target = $region44
        $region43: #{conv_autoencoder_forward.1} parent=11 // pred_region
          _
        $region44: #{conv_autoencoder_forward.1} parent=11 // pred_fallthru
          _
      $region12: #{conv_autoencoder_forward.1} parent=5 // pred_fallthru
        _
      %p305 = scmp.lt.s32.totalorder %s20, 2
      // Predicated region
      $region45: #{conv_autoencoder_forward.1} parent=5 // pred_check
        %p306 = pneg %p305
      $region46: #{conv_autoencoder_forward.1} parent=5 // pred_check_branch
        %308 = sbr.rel (%p306) target = $region48
      $region47: #{conv_autoencoder_forward.1} parent=5 // pred_region
        // Predicated region
        $region49: #{conv_autoencoder_forward.1} parent=47 // pred_check
          %p309 = pneg %p40
        $region50: #{conv_autoencoder_forward.1} parent=47 // pred_check_branch
          %311 = sbr.rel (%p309) target = $region52
        $region51: #{conv_autoencoder_forward.1} parent=47 // pred_region
          %p312 = scmp.lt.s32.totalorder %s20, 1
          %s313 = scalar_select %p312, %s20, 1
          %s314 = smul.addr %s313, 2
          %s315 = scalar_lea.vmem %s0, %s314
        $region52: #{conv_autoencoder_forward.1} parent=47 // pred_fallthru
          _
      $region48: #{conv_autoencoder_forward.1} parent=5 // pred_fallthru
        _
      %p316 = scmp.le.s32.totalorder 1, %s20
      %p317 = scmp.lt.s32.totalorder %s20, 3
      %p318 = pnand %p316, %p317
      %p319 = pneg %p318
      // Predicated region
      $region53: #{conv_autoencoder_forward.1} parent=5 // pred_check
        _
      $region54: #{conv_autoencoder_forward.1} parent=5 // pred_check_branch
        %321 = sbr.rel (%p318) target = $region56
      $region55: #{conv_autoencoder_forward.1} parent=5 // pred_region
        %s322 = ssub.s32 %s20, 1
        %p323 = scmp.lt.s32.totalorder %s25, 1
        %s324 = scalar_select %p323, %s25, 1
        %s325 = smul.addr %s324, 2
        %s326 = scalar_lea.vmem %s0, %s325
        %p327 = pneg %p46
        %p328 = pneg %p43
        %p329 = pneg %p67
        %p330 = pneg %p64
        %p331 = pneg %p88
        %p332 = pneg %p85
        %p333 = pneg %p109
        %p334 = pneg %p106
        %p335 = pneg %p130
        %p336 = pneg %p127
        %p337 = pneg %p151
        %p338 = pneg %p148
        %p339 = pneg %p172
        %p340 = pneg %p169
        %p341 = pneg %p193
        %p342 = pneg %p190
        %p343 = pneg %p214
        %p344 = pneg %p211
        %p345 = pneg %p240
        %p346 = pneg %p237
        %p347 = scmp.lt.s32.totalorder %s25, 1
        %s348 = scalar_select %p347, %s25, 1
        %s349 = smul.addr %s348, 2
        %s350 = smul.addr %s349, 8
        %s351 = scalar_lea.vmem %s9, %s350
        %p352 = pneg %p266
        %p353 = pneg %p263
        %s354 = sand.u32 %s253, 1
        %s355 = scalar_lea.sflag [#allocation3], %s354
        %s356 = sand.u32 %s253, 1
        %s357 = smul.addr %s356, 4
        %s358 = scalar_lea.vmem [#allocation2], %s357
        %p359 = scmp.lt.s32.totalorder %s25, 1
        %s360 = scalar_select %p359, %s25, 1
        %s361 = smul.addr %s360, 2
        %s362 = scalar_lea.vmem %s0, %s361
        %p363 = scmp.lt.s32.totalorder %s25, 1
        %s364 = scalar_select %p363, %s25, 1
        %s365 = smul.addr %s364, 2
        %s366 = smul.addr %s365, 8
        %s367 = scalar_lea.vmem %s9, %s366
        %v369 = vld [vmem:[%s362] sm:$0x3]
        %v372 = vunpack.c.l.s4 1983009808
        %v373 = vunpack.c.0.s8 %v372
        %v374 = vlaneseq
        %v375 = vshrl.u32 %v374, 7
        %v376 = vsub.s32 %v373, %v375
        %v377 = vrot.slane %v369, %v376
        %378 = vrot.lane.b32.xlu0 %v377, 1
        %v379 = vpop.permute.xlu0 %378
        %vm380 = vcmask 7168
        %v383 = vsel %vm380, 0, %v379
        %vm384 = vcmask 138240
        %v385 = vsel %vm384, %v383, 0
        %v387 = vrot.slane %v385, 6
        %388 = vrot.lane.b32.xlu0 %v387, 127
        %v389 = vpop.permute.xlu0 %388
        %v390 = vrot.slane %v385, 4
        %391 = vrot.lane.b32.xlu0 %v390, 126
        %v392 = vpop.permute.xlu0 %391
        %vm393 = vcmask 1041408
        %v395 = vsel %vm393, %v385, %v389
        %vm396 = vcmask 1043456
        %v398 = vsel %vm396, %v395, %v392
        %v399 = vld [vmem:[%s1] sm:$0xf]
        %v400 = vld [vmem:[%s2] sm:$0xff]
        %402 = vset.pattern.permute.xlu0 0
        %403 = vperm.xlu0 %402, %v400
        %v404 = vpop.permute.xlu0 %403
        %vm406 = vcmask 97280
        %v408 = vsel %vm406, %v399, 0
        %vm410 = vcmask 1045504
        %v411 = vsel %vm410, %v398, 0
        %413 = vmatprep.subr.bf16.mxu0 0
        %414 = vmatpush1.bf16.msra.mxu0 %v411
        %415 = vmatprep.subr.bf16.mxu0 0
        %416 = vmatpush1.bf16.msra.mxu0 0
        %417 = vmatprep.subr.bf16.mxu0 0
        %418 = vmatpush1.bf16.msra.mxu0 0
        %419 = vmatprep.subr.bf16.mxu0 0
        %420 = vmatpush1.bf16.msra.mxu0 0
        %421 = vmatprep.subr.bf16.mxu0 0
        %422 = vmatpush1.bf16.msra.mxu0 0
        %423 = vmatprep.subr.bf16.mxu0 0
        %424 = vmatpush1.bf16.msra.mxu0 0
        %425 = vmatprep.subr.bf16.mxu0 0
        %426 = vmatpush1.bf16.msra.mxu0 0
        %427 = vmatprep.subr.bf16.mxu0 0
        %428 = vmatpush1.bf16.msra.mxu0 0
        %429 = vmatprep.subr.bf16.mxu0 0
        %430 = vmatpush1.bf16.msra.mxu0 0
        %431 = vmatprep.subr.bf16.mxu0 0
        %432 = vmatpush1.bf16.msra.mxu0 0
        %433 = vmatprep.subr.bf16.mxu0 0
        %434 = vmatpush1.bf16.msra.mxu0 0
        %435 = vmatprep.subr.bf16.mxu0 0
        %436 = vmatpush1.bf16.msra.mxu0 0
        %437 = vmatprep.subr.bf16.mxu0 0
        %438 = vmatpush1.bf16.msra.mxu0 0
        %439 = vmatprep.subr.bf16.mxu0 0
        %440 = vmatpush1.bf16.msra.mxu0 0
        %441 = vmatprep.subr.bf16.mxu0 0
        %442 = vmatpush1.bf16.msra.mxu0 0
        %443 = vmatprep.subr.bf16.mxu0 0
        %444 = vmatpush1.bf16.msra.mxu0 0
        %445 = vmatprep.mubr.bf16.mxu0 0
        %446 = vmatmul.mubr.bf16.gmra.mrb[0].mxu0 %v408
        %v447 = vpop.f32.mrb[0].mxu0
        %v448 = vadd.f32 %v404, %v447
        %v449 = vpop.f32.mrb[0].mxu0
        %v450 = vpop.f32.mrb[0].mxu0
        %v451 = vpop.f32.mrb[0].mxu0
        %452 = vdwg.mxu0
        %v453 = vmax.f32 %v448, 0.0
        %455 = vrot.lane.b32.xlu0 %v453, 126
        %v456 = vpop.permute.xlu0 %455
        %458 = vrot.lane.b32.xlu0 %v453, 124
        %v459 = vpop.permute.xlu0 %458
        %461 = vrot.lane.b32.xlu0 %v453, 122
        %v462 = vpop.permute.xlu0 %461
        %464 = vrot.lane.b32.xlu0 %v453, 120
        %v465 = vpop.permute.xlu0 %464
        %467 = vrot.lane.b32.xlu0 %v453, 118
        %v468 = vpop.permute.xlu0 %467
        %470 = vrot.lane.b32.xlu0 %v453, 116
        %v471 = vpop.permute.xlu0 %470
        %473 = vrot.lane.b32.xlu0 %v453, 114
        %v474 = vpop.permute.xlu0 %473
        %v476 = vcombine.low %v453, %v459
        %v477 = vcombine.high %v453, %v459
        %v479 = vunpack.c.l.s4 1983009808
        %v480 = vunpack.c.0.s8 %v479
        %v481 = vlaneseq
        %v482 = vshrl.u32 %v481, 7
        %v483 = vsub.s32 %v480, %v482
        %v484 = vrot.slane %v476, %v483
        %v486 = vunpack.c.l.s4 1983009808
        %v487 = vunpack.c.0.s8 %v486
        %v488 = vlaneseq
        %v489 = vshrl.u32 %v488, 7
        %v490 = vsub.s32 %v487, %v489
        %v491 = vrot.slane %v477, %v490
        %v492 = vcombine.low %v456, %v462
        %v493 = vcombine.high %v456, %v462
        %v495 = vunpack.c.l.s4 1983009808
        %v496 = vunpack.c.0.s8 %v495
        %v497 = vlaneseq
        %v498 = vshrl.u32 %v497, 7
        %v499 = vsub.s32 %v496, %v498
        %v500 = vrot.slane %v492, %v499
        %v502 = vunpack.c.l.s4 1983009808
        %v503 = vunpack.c.0.s8 %v502
        %v504 = vlaneseq
        %v505 = vshrl.u32 %v504, 7
        %v506 = vsub.s32 %v503, %v505
        %v507 = vrot.slane %v493, %v506
        %v508 = vcombine.low %v465, %v471
        %v509 = vcombine.high %v465, %v471
        %v511 = vunpack.c.l.s4 1983009808
        %v512 = vunpack.c.0.s8 %v511
        %v513 = vlaneseq
        %v514 = vshrl.u32 %v513, 7
        %v515 = vsub.s32 %v512, %v514
        %v516 = vrot.slane %v508, %v515
        %v518 = vunpack.c.l.s4 1983009808
        %v519 = vunpack.c.0.s8 %v518
        %v520 = vlaneseq
        %v521 = vshrl.u32 %v520, 7
        %v522 = vsub.s32 %v519, %v521
        %v523 = vrot.slane %v509, %v522
        %v524 = vcombine.low %v468, %v474
        %v525 = vcombine.high %v468, %v474
        %v527 = vunpack.c.l.s4 1983009808
        %v528 = vunpack.c.0.s8 %v527
        %v529 = vlaneseq
        %v530 = vshrl.u32 %v529, 7
        %v531 = vsub.s32 %v528, %v530
        %v532 = vrot.slane %v524, %v531
        %v534 = vunpack.c.l.s4 1983009808
        %v535 = vunpack.c.0.s8 %v534
        %v536 = vlaneseq
        %v537 = vshrl.u32 %v536, 7
        %v538 = vsub.s32 %v535, %v537
        %v539 = vrot.slane %v525, %v538
        %v540 = vcombine.low %v484, %v500
        %v541 = vcombine.high %v484, %v500
        %v543 = vunpack.c.l.s4 1934713408
        %v544 = vunpack.c.0.s8 %v543
        %v545 = vlaneseq
        %v546 = vshrl.u32 %v545, 7
        %v547 = vsub.s32 %v544, %v546
        %v548 = vrot.slane %v540, %v547
        %v550 = vunpack.c.l.s4 1934713408
        %v551 = vunpack.c.0.s8 %v550
        %v552 = vlaneseq
        %v553 = vshrl.u32 %v552, 7
        %v554 = vsub.s32 %v551, %v553
        %v555 = vrot.slane %v541, %v554
        %v556 = vcombine.low %v491, %v507
        %v557 = vcombine.high %v491, %v507
        %v559 = vunpack.c.l.s4 1934713408
        %v560 = vunpack.c.0.s8 %v559
        %v561 = vlaneseq
        %v562 = vshrl.u32 %v561, 7
        %v563 = vsub.s32 %v560, %v562
        %v564 = vrot.slane %v556, %v563
        %v566 = vunpack.c.l.s4 1934713408
        %v567 = vunpack.c.0.s8 %v566
        %v568 = vlaneseq
        %v569 = vshrl.u32 %v568, 7
        %v570 = vsub.s32 %v567, %v569
        %v571 = vrot.slane %v557, %v570
        %v572 = vcombine.low %v516, %v532
        %v573 = vcombine.high %v516, %v532
        %v575 = vunpack.c.l.s4 1934713408
        %v576 = vunpack.c.0.s8 %v575
        %v577 = vlaneseq
        %v578 = vshrl.u32 %v577, 7
        %v579 = vsub.s32 %v576, %v578
        %v580 = vrot.slane %v572, %v579
        %v582 = vunpack.c.l.s4 1934713408
        %v583 = vunpack.c.0.s8 %v582
        %v584 = vlaneseq
        %v585 = vshrl.u32 %v584, 7
        %v586 = vsub.s32 %v583, %v585
        %v587 = vrot.slane %v573, %v586
        %v588 = vcombine.low %v523, %v539
        %v589 = vcombine.high %v523, %v539
        %v591 = vunpack.c.l.s4 1934713408
        %v592 = vunpack.c.0.s8 %v591
        %v593 = vlaneseq
        %v594 = vshrl.u32 %v593, 7
        %v595 = vsub.s32 %v592, %v594
        %v596 = vrot.slane %v588, %v595
        %v598 = vunpack.c.l.s4 1934713408
        %v599 = vunpack.c.0.s8 %v598
        %v600 = vlaneseq
        %v601 = vshrl.u32 %v600, 7
        %v602 = vsub.s32 %v599, %v601
        %v603 = vrot.slane %v589, %v602
        %v604 = vcombine.low %v548, %v580
        %v605 = vcombine.high %v548, %v580
        %v606 = vcombine.low %v555, %v587
        %v607 = vcombine.high %v555, %v587
        %v608 = vcombine.low %v564, %v596
        %v609 = vcombine.high %v564, %v596
        %v610 = vcombine.low %v571, %v603
        %v611 = vcombine.high %v571, %v603
        %vm612 = vcmask 15360
        %v613 = vsel %vm612, %v604, -inf
        %614 = vmax.xlane.f32.xlu0 %v613
        %v615 = vpop.xlane.xlu0 %614
        %v616 = vsel %vm612, %v605, -inf
        %617 = vmax.xlane.f32.xlu0 %v616
        %v618 = vpop.xlane.xlu0 %617
        %v619 = vsel %vm612, %v606, -inf
        %620 = vmax.xlane.f32.xlu0 %v619
        %v621 = vpop.xlane.xlu0 %620
        %v622 = vsel %vm612, %v607, -inf
        %623 = vmax.xlane.f32.xlu0 %v622
        %v624 = vpop.xlane.xlu0 %623
        %v625 = vsel %vm612, %v608, -inf
        %626 = vmax.xlane.f32.xlu0 %v625
        %v627 = vpop.xlane.xlu0 %626
        %v628 = vsel %vm612, %v609, -inf
        %629 = vmax.xlane.f32.xlu0 %v628
        %v630 = vpop.xlane.xlu0 %629
        %v631 = vsel %vm612, %v610, -inf
        %632 = vmax.xlane.f32.xlu0 %v631
        %v633 = vpop.xlane.xlu0 %632
        %v634 = vsel %vm612, %v611, -inf
        %635 = vmax.xlane.f32.xlu0 %v634
        %v636 = vpop.xlane.xlu0 %635
        %v637 = vpack.c.bf16 %v615, %v615
        %v638 = vpack.c.bf16 %v618, %v618
        %v639 = vpack.c.bf16 %v621, %v621
        %v640 = vpack.c.bf16 %v624, %v624
        %v641 = vpack.c.bf16 %v627, %v627
        %v642 = vpack.c.bf16 %v630, %v630
        %v643 = vpack.c.bf16 %v633, %v633
        %v644 = vpack.c.bf16 %v636, %v636
        %v653 = vunpack.c.l.b16 %v637
        %v654 = vunpack.c.l.b16 %v638
        %v655 = vunpack.c.l.b16 %v639
        %v656 = vunpack.c.l.b16 %v640
        %v657 = vunpack.c.l.b16 %v641
        %v658 = vunpack.c.l.b16 %v642
        %v659 = vunpack.c.l.b16 %v643
        %v660 = vunpack.c.l.b16 %v644
        %v661 = vlaneseq
        %v662 = vand.u32 %v661, 127
        %v663 = vadd.s32 %v662, 4294967295
        %v664 = vlaneseq
        %v665 = vshrl.u32 %v664, 7
        %v666 = vsub.s32 %v663, %v665
        %v667 = vrot.slane %v653, %v666
        %v668 = vlaneseq
        %v669 = vshrl.u32 %v668, 7
        %v670 = vsub.s32 %v663, %v669
        %v671 = vrot.slane %v654, %v670
        %v672 = vlaneseq
        %v673 = vshrl.u32 %v672, 7
        %v674 = vsub.s32 %v663, %v673
        %v675 = vrot.slane %v655, %v674
        %v676 = vlaneseq
        %v677 = vshrl.u32 %v676, 7
        %v678 = vsub.s32 %v663, %v677
        %v679 = vrot.slane %v656, %v678
        %v680 = vlaneseq
        %v681 = vshrl.u32 %v680, 7
        %v682 = vsub.s32 %v663, %v681
        %v683 = vrot.slane %v657, %v682
        %v684 = vlaneseq
        %v685 = vshrl.u32 %v684, 7
        %v686 = vsub.s32 %v663, %v685
        %v687 = vrot.slane %v658, %v686
        %v688 = vlaneseq
        %v689 = vshrl.u32 %v688, 7
        %v690 = vsub.s32 %v663, %v689
        %v691 = vrot.slane %v659, %v690
        %v692 = vlaneseq
        %v693 = vshrl.u32 %v692, 7
        %v694 = vsub.s32 %v663, %v693
        %v695 = vrot.slane %v660, %v694
        %vm696 = vcmask 1041409
        %v697 = vsel %vm696, %v671, %v667
        %vm698 = vcmask 1042434
        %v699 = vsel %vm698, %v675, %v697
        %vm700 = vcmask 1043459
        %v701 = vsel %vm700, %v679, %v699
        %vm702 = vcmask 1044484
        %v703 = vsel %vm702, %v683, %v701
        %vm704 = vcmask 1045509
        %v705 = vsel %vm704, %v687, %v703
        %vm706 = vcmask 1046534
        %v707 = vsel %vm706, %v691, %v705
        %vm708 = vcmask 1047559
        %v709 = vsel %vm708, %v695, %v707
        %v710 = vpack.c.b16 %v709, %v709
        %v712 = vsel %vm380, 0, %v710
        %vm713 = vcmask 72704
        %v714 = vsel %vm713, %v712, 0
        %v716 = vrot.slane %v714, 4
        %717 = vrot.lane.b32.xlu0 %v716, 127
        %v718 = vpop.permute.xlu0 %717
        %719 = vrot.lane.b32.xlu0 %v714, 126
        %v720 = vpop.permute.xlu0 %719
        %v722 = vsel %vm396, %v714, %v718
        %v724 = vld [vmem:[%s3] sm:$0xf]
        %v725 = vld [vmem:[%s3 + $0x4] sm:$0xf]
        %v726 = vld [vmem:[%s4] sm:$0xff]
        %v727 = vld [vmem:[%s4 + $0x8] sm:$0xff]
        %729 = vset.pattern.permute.xlu0 0
        %730 = vperm.xlu0 %729, %v726
        %v731 = vpop.permute.xlu0 %730
        %734 = vset.pattern.permute.xlu0 0
        %735 = vperm.xlu0 %734, %v727
        %v736 = vpop.permute.xlu0 %735
        %v740 = vunpack.c.l.b16 %v724
        %v741 = vunpack.c.l.b16 %v725
        %v742 = vpack.c.b16 %v741, %v740
        %vm743 = vcmask 195584
        %v745 = vsel %vm743, %v742, 0
        %v748 = vsel %vm396, %v720, 0
        %750 = vmatprep.subr.bf16.mxu0 0
        %751 = vmatpush1.bf16.msra.mxu0 %v722
        %752 = vmatprep.subr.bf16.mxu0 0
        %753 = vmatpush1.bf16.msra.mxu0 %v748
        %754 = vmatprep.subr.bf16.mxu0 0
        %755 = vmatpush1.bf16.msra.mxu0 0
        %756 = vmatprep.subr.bf16.mxu0 0
        %757 = vmatpush1.bf16.msra.mxu0 0
        %758 = vmatprep.subr.bf16.mxu0 0
        %759 = vmatpush1.bf16.msra.mxu0 0
        %760 = vmatprep.subr.bf16.mxu0 0
        %761 = vmatpush1.bf16.msra.mxu0 0
        %762 = vmatprep.subr.bf16.mxu0 0
        %763 = vmatpush1.bf16.msra.mxu0 0
        %764 = vmatprep.subr.bf16.mxu0 0
        %765 = vmatpush1.bf16.msra.mxu0 0
        %766 = vmatprep.subr.bf16.mxu0 0
        %767 = vmatpush1.bf16.msra.mxu0 0
        %768 = vmatprep.subr.bf16.mxu0 0
        %769 = vmatpush1.bf16.msra.mxu0 0
        %770 = vmatprep.subr.bf16.mxu0 0
        %771 = vmatpush1.bf16.msra.mxu0 0
        %772 = vmatprep.subr.bf16.mxu0 0
        %773 = vmatpush1.bf16.msra.mxu0 0
        %774 = vmatprep.subr.bf16.mxu0 0
        %775 = vmatpush1.bf16.msra.mxu0 0
        %776 = vmatprep.subr.bf16.mxu0 0
        %777 = vmatpush1.bf16.msra.mxu0 0
        %778 = vmatprep.subr.bf16.mxu0 0
        %779 = vmatpush1.bf16.msra.mxu0 0
        %780 = vmatprep.subr.bf16.mxu0 0
        %781 = vmatpush1.bf16.msra.mxu0 0
        %782 = vmatprep.mubr.bf16.mxu0 0
        %783 = vmatmul.mubr.bf16.gmra.mrb[0].mxu0 %v745
        %v784 = vpop.f32.mrb[0].mxu0
        %v785 = vadd.f32 %v731, %v784
        %v786 = vpop.f32.mrb[0].mxu0
        %v787 = vpop.f32.mrb[0].mxu0
        %v788 = vadd.f32 %v736, %v787
        %v789 = vpop.f32.mrb[0].mxu0
        %790 = vdwg.mxu0
        %v791 = vmax.f32 %v785, 0.0
        %v792 = vmax.f32 %v788, 0.0
        %795 = vrot.lane.b32.xlu0 %v791, 126
        %v796 = vpop.permute.xlu0 %795
        %797 = vrot.lane.b32.xlu0 %v792, 126
        %v798 = vpop.permute.xlu0 %797
        %801 = vrot.lane.b32.xlu0 %v791, 124
        %v802 = vpop.permute.xlu0 %801
        %803 = vrot.lane.b32.xlu0 %v792, 124
        %v804 = vpop.permute.xlu0 %803
        %807 = vrot.lane.b32.xlu0 %v791, 122
        %v808 = vpop.permute.xlu0 %807
        %809 = vrot.lane.b32.xlu0 %v792, 122
        %v810 = vpop.permute.xlu0 %809
        %v813 = vcombine.low %v791, %v802
        %v814 = vcombine.high %v791, %v802
        %v816 = vunpack.c.l.s4 1983009808
        %v817 = vunpack.c.0.s8 %v816
        %v818 = vlaneseq
        %v819 = vshrl.u32 %v818, 7
        %v820 = vsub.s32 %v817, %v819
        %v821 = vrot.slane %v813, %v820
        %v823 = vunpack.c.l.s4 1983009808
        %v824 = vunpack.c.0.s8 %v823
        %v825 = vlaneseq
        %v826 = vshrl.u32 %v825, 7
        %v827 = vsub.s32 %v824, %v826
        %v828 = vrot.slane %v814, %v827
        %v829 = vcombine.low %v796, %v808
        %v830 = vcombine.high %v796, %v808
        %v832 = vunpack.c.l.s4 1983009808
        %v833 = vunpack.c.0.s8 %v832
        %v834 = vlaneseq
        %v835 = vshrl.u32 %v834, 7
        %v836 = vsub.s32 %v833, %v835
        %v837 = vrot.slane %v829, %v836
        %v839 = vunpack.c.l.s4 1983009808
        %v840 = vunpack.c.0.s8 %v839
        %v841 = vlaneseq
        %v842 = vshrl.u32 %v841, 7
        %v843 = vsub.s32 %v840, %v842
        %v844 = vrot.slane %v830, %v843
        %v845 = vcombine.low %v821, %v837
        %v846 = vcombine.high %v821, %v837
        %v848 = vunpack.c.l.s4 1934713408
        %v849 = vunpack.c.0.s8 %v848
        %v850 = vlaneseq
        %v851 = vshrl.u32 %v850, 7
        %v852 = vsub.s32 %v849, %v851
        %v853 = vrot.slane %v845, %v852
        %v855 = vunpack.c.l.s4 1934713408
        %v856 = vunpack.c.0.s8 %v855
        %v857 = vlaneseq
        %v858 = vshrl.u32 %v857, 7
        %v859 = vsub.s32 %v856, %v858
        %v860 = vrot.slane %v846, %v859
        %v861 = vcombine.low %v828, %v844
        %v862 = vcombine.high %v828, %v844
        %v864 = vunpack.c.l.s4 1934713408
        %v865 = vunpack.c.0.s8 %v864
        %v866 = vlaneseq
        %v867 = vshrl.u32 %v866, 7
        %v868 = vsub.s32 %v865, %v867
        %v869 = vrot.slane %v861, %v868
        %v871 = vunpack.c.l.s4 1934713408
        %v872 = vunpack.c.0.s8 %v871
        %v873 = vlaneseq
        %v874 = vshrl.u32 %v873, 7
        %v875 = vsub.s32 %v872, %v874
        %v876 = vrot.slane %v862, %v875
        %v877 = vcombine.high %v853, 0.0
        %v878 = vcombine.high %v860, 0.0
        %v879 = vcombine.high %v869, 0.0
        %v880 = vcombine.high %v876, 0.0
        %v881 = vcombine.low %v792, %v804
        %v882 = vcombine.high %v792, %v804
        %v884 = vunpack.c.l.s4 1983009808
        %v885 = vunpack.c.0.s8 %v884
        %v886 = vlaneseq
        %v887 = vshrl.u32 %v886, 7
        %v888 = vsub.s32 %v885, %v887
        %v889 = vrot.slane %v881, %v888
        %v891 = vunpack.c.l.s4 1983009808
        %v892 = vunpack.c.0.s8 %v891
        %v893 = vlaneseq
        %v894 = vshrl.u32 %v893, 7
        %v895 = vsub.s32 %v892, %v894
        %v896 = vrot.slane %v882, %v895
        %v897 = vcombine.low %v798, %v810
        %v898 = vcombine.high %v798, %v810
        %v900 = vunpack.c.l.s4 1983009808
        %v901 = vunpack.c.0.s8 %v900
        %v902 = vlaneseq
        %v903 = vshrl.u32 %v902, 7
        %v904 = vsub.s32 %v901, %v903
        %v905 = vrot.slane %v897, %v904
        %v907 = vunpack.c.l.s4 1983009808
        %v908 = vunpack.c.0.s8 %v907
        %v909 = vlaneseq
        %v910 = vshrl.u32 %v909, 7
        %v911 = vsub.s32 %v908, %v910
        %v912 = vrot.slane %v898, %v911
        %v913 = vcombine.low %v889, %v905
        %v914 = vcombine.high %v889, %v905
        %v916 = vunpack.c.l.s4 1934713408
        %v917 = vunpack.c.0.s8 %v916
        %v918 = vlaneseq
        %v919 = vshrl.u32 %v918, 7
        %v920 = vsub.s32 %v917, %v919
        %v921 = vrot.slane %v913, %v920
        %v923 = vunpack.c.l.s4 1934713408
        %v924 = vunpack.c.0.s8 %v923
        %v925 = vlaneseq
        %v926 = vshrl.u32 %v925, 7
        %v927 = vsub.s32 %v924, %v926
        %v928 = vrot.slane %v914, %v927
        %v929 = vcombine.low %v896, %v912
        %v930 = vcombine.high %v896, %v912
        %v932 = vunpack.c.l.s4 1934713408
        %v933 = vunpack.c.0.s8 %v932
        %v934 = vlaneseq
        %v935 = vshrl.u32 %v934, 7
        %v936 = vsub.s32 %v933, %v935
        %v937 = vrot.slane %v929, %v936
        %v939 = vunpack.c.l.s4 1934713408
        %v940 = vunpack.c.0.s8 %v939
        %v941 = vlaneseq
        %v942 = vshrl.u32 %v941, 7
        %v943 = vsub.s32 %v940, %v942
        %v944 = vrot.slane %v930, %v943
        %v945 = vcombine.high %v921, 0.0
        %v946 = vcombine.high %v928, 0.0
        %v947 = vcombine.high %v937, 0.0
        %v948 = vcombine.high %v944, 0.0
        %vm949 = vcmask 11264
        %v950 = vsel %vm949, %v853, -inf
        %951 = vmax.xlane.f32.xlu0 %v950
        %v952 = vpop.xlane.xlu0 %951
        %v953 = vsel %vm949, %v877, -inf
        %954 = vmax.xlane.f32.xlu0 %v953
        %v955 = vpop.xlane.xlu0 %954
        %v956 = vsel %vm949, %v860, -inf
        %957 = vmax.xlane.f32.xlu0 %v956
        %v958 = vpop.xlane.xlu0 %957
        %v959 = vsel %vm949, %v878, -inf
        %960 = vmax.xlane.f32.xlu0 %v959
        %v961 = vpop.xlane.xlu0 %960
        %v962 = vsel %vm949, %v869, -inf
        %963 = vmax.xlane.f32.xlu0 %v962
        %v964 = vpop.xlane.xlu0 %963
        %v965 = vsel %vm949, %v879, -inf
        %966 = vmax.xlane.f32.xlu0 %v965
        %v967 = vpop.xlane.xlu0 %966
        %v968 = vsel %vm949, %v876, -inf
        %969 = vmax.xlane.f32.xlu0 %v968
        %v970 = vpop.xlane.xlu0 %969
        %v971 = vsel %vm949, %v880, -inf
        %972 = vmax.xlane.f32.xlu0 %v971
        %v973 = vpop.xlane.xlu0 %972
        %v974 = vsel %vm949, %v921, -inf
        %975 = vmax.xlane.f32.xlu0 %v974
        %v976 = vpop.xlane.xlu0 %975
        %v977 = vsel %vm949, %v945, -inf
        %978 = vmax.xlane.f32.xlu0 %v977
        %v979 = vpop.xlane.xlu0 %978
        %v980 = vsel %vm949, %v928, -inf
        %981 = vmax.xlane.f32.xlu0 %v980
        %v982 = vpop.xlane.xlu0 %981
        %v983 = vsel %vm949, %v946, -inf
        %984 = vmax.xlane.f32.xlu0 %v983
        %v985 = vpop.xlane.xlu0 %984
        %v986 = vsel %vm949, %v937, -inf
        %987 = vmax.xlane.f32.xlu0 %v986
        %v988 = vpop.xlane.xlu0 %987
        %v989 = vsel %vm949, %v947, -inf
        %990 = vmax.xlane.f32.xlu0 %v989
        %v991 = vpop.xlane.xlu0 %990
        %v992 = vsel %vm949, %v944, -inf
        %993 = vmax.xlane.f32.xlu0 %v992
        %v994 = vpop.xlane.xlu0 %993
        %v995 = vsel %vm949, %v948, -inf
        %996 = vmax.xlane.f32.xlu0 %v995
        %v997 = vpop.xlane.xlu0 %996
        %v1014 = vlaneseq
        %v1015 = vshrl.u32 %v1014, 7
        %v1016 = vsub.s32 %v662, %v1015
        %v1017 = vrot.slane %v952, %v1016
        %v1018 = vlaneseq
        %v1019 = vshrl.u32 %v1018, 7
        %v1020 = vsub.s32 %v662, %v1019
        %v1021 = vrot.slane %v955, %v1020
        %v1022 = vlaneseq
        %v1023 = vshrl.u32 %v1022, 7
        %v1024 = vsub.s32 %v662, %v1023
        %v1025 = vrot.slane %v958, %v1024
        %v1026 = vlaneseq
        %v1027 = vshrl.u32 %v1026, 7
        %v1028 = vsub.s32 %v662, %v1027
        %v1029 = vrot.slane %v961, %v1028
        %v1030 = vlaneseq
        %v1031 = vshrl.u32 %v1030, 7
        %v1032 = vsub.s32 %v662, %v1031
        %v1033 = vrot.slane %v964, %v1032
        %v1034 = vlaneseq
        %v1035 = vshrl.u32 %v1034, 7
        %v1036 = vsub.s32 %v662, %v1035
        %v1037 = vrot.slane %v967, %v1036
        %v1038 = vlaneseq
        %v1039 = vshrl.u32 %v1038, 7
        %v1040 = vsub.s32 %v662, %v1039
        %v1041 = vrot.slane %v970, %v1040
        %v1042 = vlaneseq
        %v1043 = vshrl.u32 %v1042, 7
        %v1044 = vsub.s32 %v662, %v1043
        %v1045 = vrot.slane %v973, %v1044
        %v1046 = vlaneseq
        %v1047 = vshrl.u32 %v1046, 7
        %v1048 = vsub.s32 %v662, %v1047
        %v1049 = vrot.slane %v976, %v1048
        %v1050 = vlaneseq
        %v1051 = vshrl.u32 %v1050, 7
        %v1052 = vsub.s32 %v662, %v1051
        %v1053 = vrot.slane %v979, %v1052
        %v1054 = vlaneseq
        %v1055 = vshrl.u32 %v1054, 7
        %v1056 = vsub.s32 %v662, %v1055
        %v1057 = vrot.slane %v982, %v1056
        %v1058 = vlaneseq
        %v1059 = vshrl.u32 %v1058, 7
        %v1060 = vsub.s32 %v662, %v1059
        %v1061 = vrot.slane %v985, %v1060
        %v1062 = vlaneseq
        %v1063 = vshrl.u32 %v1062, 7
        %v1064 = vsub.s32 %v662, %v1063
        %v1065 = vrot.slane %v988, %v1064
        %v1066 = vlaneseq
        %v1067 = vshrl.u32 %v1066, 7
        %v1068 = vsub.s32 %v662, %v1067
        %v1069 = vrot.slane %v991, %v1068
        %v1070 = vlaneseq
        %v1071 = vshrl.u32 %v1070, 7
        %v1072 = vsub.s32 %v662, %v1071
        %v1073 = vrot.slane %v994, %v1072
        %v1074 = vlaneseq
        %v1075 = vshrl.u32 %v1074, 7
        %v1076 = vsub.s32 %v662, %v1075
        %v1077 = vrot.slane %v997, %v1076
        %v1078 = vsel %vm696, %v1021, %v1017
        %v1079 = vsel %vm698, %v1025, %v1078
        %v1080 = vsel %vm700, %v1029, %v1079
        %v1081 = vsel %vm702, %v1033, %v1080
        %v1082 = vsel %vm704, %v1037, %v1081
        %v1083 = vsel %vm706, %v1041, %v1082
        %v1084 = vsel %vm708, %v1045, %v1083
        %v1085 = vsel %vm696, %v1053, %v1049
        %v1086 = vsel %vm698, %v1057, %v1085
        %v1087 = vsel %vm700, %v1061, %v1086
        %v1088 = vsel %vm702, %v1065, %v1087
        %v1089 = vsel %vm704, %v1069, %v1088
        %v1090 = vsel %vm706, %v1073, %v1089
        %v1091 = vsel %vm708, %v1077, %v1090
        %vm1094 = vcmask 31744
        %1095 = vst.msk [vmem:[%s367] sm:$0xff] %vm1094, %v1084
        %1096 = vst.msk [vmem:[%s367 + $0x8] sm:$0xff] %vm1094, %v1091
        %v1097 = vrot.slane %v955, 7
        %v1098 = vsel %vm696, %v1097, %v952
        %v1099 = vrot.slane %v958, 6
        %v1100 = vsel %vm698, %v1099, %v1098
        %v1101 = vrot.slane %v961, 5
        %v1102 = vsel %vm700, %v1101, %v1100
        %v1103 = vrot.slane %v964, 4
        %v1104 = vsel %vm702, %v1103, %v1102
        %v1105 = vrot.slane %v967, 3
        %v1106 = vsel %vm704, %v1105, %v1104
        %v1107 = vrot.slane %v970, 2
        %v1108 = vsel %vm706, %v1107, %v1106
        %v1109 = vrot.slane %v973, 1
        %v1110 = vsel %vm708, %v1109, %v1108
        %v1111 = vrot.slane %v979, 7
        %v1112 = vsel %vm696, %v1111, %v976
        %v1113 = vrot.slane %v982, 6
        %v1114 = vsel %vm698, %v1113, %v1112
        %v1115 = vrot.slane %v985, 5
        %v1116 = vsel %vm700, %v1115, %v1114
        %v1117 = vrot.slane %v988, 4
        %v1118 = vsel %vm702, %v1117, %v1116
        %v1119 = vrot.slane %v991, 3
        %v1120 = vsel %vm704, %v1119, %v1118
        %v1121 = vrot.slane %v994, 2
        %v1122 = vsel %vm706, %v1121, %v1120
        %v1123 = vrot.slane %v997, 1
        %v1124 = vsel %vm708, %v1123, %v1122
        %v1127 = vlaneseq
        %v1128 = vshrl.u32 %v1127, 7
        %v1129 = vsub.s32 %v663, %v1128
        %v1130 = vrot.slane %v952, %v1129
        %v1131 = vlaneseq
        %v1132 = vshrl.u32 %v1131, 7
        %v1133 = vsub.s32 %v663, %v1132
        %v1134 = vrot.slane %v955, %v1133
        %v1135 = vlaneseq
        %v1136 = vshrl.u32 %v1135, 7
        %v1137 = vsub.s32 %v663, %v1136
        %v1138 = vrot.slane %v958, %v1137
        %v1139 = vlaneseq
        %v1140 = vshrl.u32 %v1139, 7
        %v1141 = vsub.s32 %v663, %v1140
        %v1142 = vrot.slane %v961, %v1141
        %v1143 = vlaneseq
        %v1144 = vshrl.u32 %v1143, 7
        %v1145 = vsub.s32 %v663, %v1144
        %v1146 = vrot.slane %v964, %v1145
        %v1147 = vlaneseq
        %v1148 = vshrl.u32 %v1147, 7
        %v1149 = vsub.s32 %v663, %v1148
        %v1150 = vrot.slane %v967, %v1149
        %v1151 = vlaneseq
        %v1152 = vshrl.u32 %v1151, 7
        %v1153 = vsub.s32 %v663, %v1152
        %v1154 = vrot.slane %v970, %v1153
        %v1155 = vlaneseq
        %v1156 = vshrl.u32 %v1155, 7
        %v1157 = vsub.s32 %v663, %v1156
        %v1158 = vrot.slane %v973, %v1157
        %v1159 = vlaneseq
        %v1160 = vshrl.u32 %v1159, 7
        %v1161 = vsub.s32 %v663, %v1160
        %v1162 = vrot.slane %v976, %v1161
        %v1163 = vlaneseq
        %v1164 = vshrl.u32 %v1163, 7
        %v1165 = vsub.s32 %v663, %v1164
        %v1166 = vrot.slane %v979, %v1165
        %v1167 = vlaneseq
        %v1168 = vshrl.u32 %v1167, 7
        %v1169 = vsub.s32 %v663, %v1168
        %v1170 = vrot.slane %v982, %v1169
        %v1171 = vlaneseq
        %v1172 = vshrl.u32 %v1171, 7
        %v1173 = vsub.s32 %v663, %v1172
        %v1174 = vrot.slane %v985, %v1173
        %v1175 = vlaneseq
        %v1176 = vshrl.u32 %v1175, 7
        %v1177 = vsub.s32 %v663, %v1176
        %v1178 = vrot.slane %v988, %v1177
        %v1179 = vlaneseq
        %v1180 = vshrl.u32 %v1179, 7
        %v1181 = vsub.s32 %v663, %v1180
        %v1182 = vrot.slane %v991, %v1181
        %v1183 = vlaneseq
        %v1184 = vshrl.u32 %v1183, 7
        %v1185 = vsub.s32 %v663, %v1184
        %v1186 = vrot.slane %v994, %v1185
        %v1187 = vlaneseq
        %v1188 = vshrl.u32 %v1187, 7
        %v1189 = vsub.s32 %v663, %v1188
        %v1190 = vrot.slane %v997, %v1189
        %v1191 = vsel %vm696, %v1134, %v1130
        %v1192 = vsel %vm698, %v1138, %v1191
        %v1193 = vsel %vm700, %v1142, %v1192
        %v1194 = vsel %vm702, %v1146, %v1193
        %v1195 = vsel %vm704, %v1150, %v1194
        %v1196 = vsel %vm706, %v1154, %v1195
        %v1197 = vsel %vm708, %v1158, %v1196
        %v1198 = vsel %vm696, %v1166, %v1162
        %v1199 = vsel %vm698, %v1170, %v1198
        %v1200 = vsel %vm700, %v1174, %v1199
        %v1201 = vsel %vm702, %v1178, %v1200
        %v1202 = vsel %vm704, %v1182, %v1201
        %v1203 = vsel %vm706, %v1186, %v1202
        %v1204 = vsel %vm708, %v1190, %v1203
        %v1207 = vsel %vm380, %v1110, %v1197
        %v1208 = vsel %vm380, %v1124, %v1204
        %v1209 = vadd.s32 %v662, 1
        %v1210 = vlaneseq
        %v1211 = vshrl.u32 %v1210, 7
        %v1212 = vsub.s32 %v1209, %v1211
        %v1213 = vrot.slane %v952, %v1212
        %v1214 = vlaneseq
        %v1215 = vshrl.u32 %v1214, 7
        %v1216 = vsub.s32 %v1209, %v1215
        %v1217 = vrot.slane %v955, %v1216
        %v1218 = vlaneseq
        %v1219 = vshrl.u32 %v1218, 7
        %v1220 = vsub.s32 %v1209, %v1219
        %v1221 = vrot.slane %v958, %v1220
        %v1222 = vlaneseq
        %v1223 = vshrl.u32 %v1222, 7
        %v1224 = vsub.s32 %v1209, %v1223
        %v1225 = vrot.slane %v961, %v1224
        %v1226 = vlaneseq
        %v1227 = vshrl.u32 %v1226, 7
        %v1228 = vsub.s32 %v1209, %v1227
        %v1229 = vrot.slane %v964, %v1228
        %v1230 = vlaneseq
        %v1231 = vshrl.u32 %v1230, 7
        %v1232 = vsub.s32 %v1209, %v1231
        %v1233 = vrot.slane %v967, %v1232
        %v1234 = vlaneseq
        %v1235 = vshrl.u32 %v1234, 7
        %v1236 = vsub.s32 %v1209, %v1235
        %v1237 = vrot.slane %v970, %v1236
        %v1238 = vlaneseq
        %v1239 = vshrl.u32 %v1238, 7
        %v1240 = vsub.s32 %v1209, %v1239
        %v1241 = vrot.slane %v973, %v1240
        %v1242 = vlaneseq
        %v1243 = vshrl.u32 %v1242, 7
        %v1244 = vsub.s32 %v1209, %v1243
        %v1245 = vrot.slane %v976, %v1244
        %v1246 = vlaneseq
        %v1247 = vshrl.u32 %v1246, 7
        %v1248 = vsub.s32 %v1209, %v1247
        %v1249 = vrot.slane %v979, %v1248
        %v1250 = vlaneseq
        %v1251 = vshrl.u32 %v1250, 7
        %v1252 = vsub.s32 %v1209, %v1251
        %v1253 = vrot.slane %v982, %v1252
        %v1254 = vlaneseq
        %v1255 = vshrl.u32 %v1254, 7
        %v1256 = vsub.s32 %v1209, %v1255
        %v1257 = vrot.slane %v985, %v1256
        %v1258 = vlaneseq
        %v1259 = vshrl.u32 %v1258, 7
        %v1260 = vsub.s32 %v1209, %v1259
        %v1261 = vrot.slane %v988, %v1260
        %v1262 = vlaneseq
        %v1263 = vshrl.u32 %v1262, 7
        %v1264 = vsub.s32 %v1209, %v1263
        %v1265 = vrot.slane %v991, %v1264
        %v1266 = vlaneseq
        %v1267 = vshrl.u32 %v1266, 7
        %v1268 = vsub.s32 %v1209, %v1267
        %v1269 = vrot.slane %v994, %v1268
        %v1270 = vlaneseq
        %v1271 = vshrl.u32 %v1270, 7
        %v1272 = vsub.s32 %v1209, %v1271
        %v1273 = vrot.slane %v997, %v1272
        %v1274 = vsel %vm698, %v1217, %v1213
        %v1275 = vsel %vm700, %v1221, %v1274
        %v1276 = vsel %vm702, %v1225, %v1275
        %v1277 = vsel %vm704, %v1229, %v1276
        %v1278 = vsel %vm706, %v1233, %v1277
        %v1279 = vsel %vm708, %v1237, %v1278
        %v1280 = vsel %vm696, %v1245, %v1241
        %v1281 = vsel %vm698, %v1249, %v1280
        %v1282 = vsel %vm700, %v1253, %v1281
        %v1283 = vsel %vm702, %v1257, %v1282
        %v1284 = vsel %vm704, %v1261, %v1283
        %v1285 = vsel %vm706, %v1265, %v1284
        %v1286 = vsel %vm708, %v1269, %v1285
        %v1290 = vrot.slane %v952, 2
        %v1291 = vrot.slane %v955, 1
        %v1292 = vsel %vm698, %v1291, %v1290
        %v1293 = vsel %vm700, %v958, %v1292
        %v1294 = vrot.slane %v961, 7
        %v1295 = vsel %vm702, %v1294, %v1293
        %v1296 = vrot.slane %v964, 6
        %v1297 = vsel %vm704, %v1296, %v1295
        %v1298 = vrot.slane %v967, 5
        %v1299 = vsel %vm706, %v1298, %v1297
        %v1300 = vrot.slane %v970, 4
        %v1301 = vsel %vm708, %v1300, %v1299
        %v1302 = vrot.slane %v973, 3
        %v1303 = vrot.slane %v976, 2
        %v1304 = vsel %vm696, %v1303, %v1302
        %v1305 = vrot.slane %v979, 1
        %v1306 = vsel %vm698, %v1305, %v1304
        %v1307 = vsel %vm700, %v982, %v1306
        %v1308 = vrot.slane %v985, 7
        %v1309 = vsel %vm702, %v1308, %v1307
        %v1310 = vrot.slane %v988, 6
        %v1311 = vsel %vm704, %v1310, %v1309
        %v1312 = vrot.slane %v991, 5
        %v1313 = vsel %vm706, %v1312, %v1311
        %v1314 = vrot.slane %v994, 4
        %v1315 = vsel %vm708, %v1314, %v1313
        %v1316 = vrot.slane %v997, 3
        %vm1320 = vcmask 23552
        %v1321 = vsel %vm1320, %v1279, %v1301
        %v1322 = vsel %vm1320, %v1286, %v1315
        %v1323 = vsel %vm1320, %v1273, %v1316
        %v1324 = vmul.f32 %v1207, 0.25
        %v1325 = vmul.f32 %v1208, 0.25
        %v1326 = vmul.f32 %v952, 0.75
        %v1327 = vmul.f32 %v955, 0.75
        %v1328 = vmul.f32 %v958, 0.75
        %v1329 = vmul.f32 %v961, 0.75
        %v1330 = vmul.f32 %v964, 0.75
        %v1331 = vmul.f32 %v967, 0.75
        %v1332 = vmul.f32 %v970, 0.75
        %v1333 = vmul.f32 %v973, 0.75
        %v1334 = vmul.f32 %v976, 0.75
        %v1335 = vmul.f32 %v979, 0.75
        %v1336 = vmul.f32 %v982, 0.75
        %v1337 = vmul.f32 %v985, 0.75
        %v1338 = vmul.f32 %v988, 0.75
        %v1339 = vmul.f32 %v991, 0.75
        %v1340 = vmul.f32 %v994, 0.75
        %v1341 = vmul.f32 %v997, 0.75
        %v1358 = vlaneseq
        %v1359 = vshrl.u32 %v1358, 7
        %v1360 = vsub.s32 %v662, %v1359
        %v1361 = vrot.slane %v1326, %v1360
        %v1362 = vlaneseq
        %v1363 = vshrl.u32 %v1362, 7
        %v1364 = vsub.s32 %v662, %v1363
        %v1365 = vrot.slane %v1327, %v1364
        %v1366 = vlaneseq
        %v1367 = vshrl.u32 %v1366, 7
        %v1368 = vsub.s32 %v662, %v1367
        %v1369 = vrot.slane %v1328, %v1368
        %v1370 = vlaneseq
        %v1371 = vshrl.u32 %v1370, 7
        %v1372 = vsub.s32 %v662, %v1371
        %v1373 = vrot.slane %v1329, %v1372
        %v1374 = vlaneseq
        %v1375 = vshrl.u32 %v1374, 7
        %v1376 = vsub.s32 %v662, %v1375
        %v1377 = vrot.slane %v1330, %v1376
        %v1378 = vlaneseq
        %v1379 = vshrl.u32 %v1378, 7
        %v1380 = vsub.s32 %v662, %v1379
        %v1381 = vrot.slane %v1331, %v1380
        %v1382 = vlaneseq
        %v1383 = vshrl.u32 %v1382, 7
        %v1384 = vsub.s32 %v662, %v1383
        %v1385 = vrot.slane %v1332, %v1384
        %v1386 = vlaneseq
        %v1387 = vshrl.u32 %v1386, 7
        %v1388 = vsub.s32 %v662, %v1387
        %v1389 = vrot.slane %v1333, %v1388
        %v1390 = vlaneseq
        %v1391 = vshrl.u32 %v1390, 7
        %v1392 = vsub.s32 %v662, %v1391
        %v1393 = vrot.slane %v1334, %v1392
        %v1394 = vlaneseq
        %v1395 = vshrl.u32 %v1394, 7
        %v1396 = vsub.s32 %v662, %v1395
        %v1397 = vrot.slane %v1335, %v1396
        %v1398 = vlaneseq
        %v1399 = vshrl.u32 %v1398, 7
        %v1400 = vsub.s32 %v662, %v1399
        %v1401 = vrot.slane %v1336, %v1400
        %v1402 = vlaneseq
        %v1403 = vshrl.u32 %v1402, 7
        %v1404 = vsub.s32 %v662, %v1403
        %v1405 = vrot.slane %v1337, %v1404
        %v1406 = vlaneseq
        %v1407 = vshrl.u32 %v1406, 7
        %v1408 = vsub.s32 %v662, %v1407
        %v1409 = vrot.slane %v1338, %v1408
        %v1410 = vlaneseq
        %v1411 = vshrl.u32 %v1410, 7
        %v1412 = vsub.s32 %v662, %v1411
        %v1413 = vrot.slane %v1339, %v1412
        %v1414 = vlaneseq
        %v1415 = vshrl.u32 %v1414, 7
        %v1416 = vsub.s32 %v662, %v1415
        %v1417 = vrot.slane %v1340, %v1416
        %v1418 = vlaneseq
        %v1419 = vshrl.u32 %v1418, 7
        %v1420 = vsub.s32 %v662, %v1419
        %v1421 = vrot.slane %v1341, %v1420
        %v1422 = vsel %vm696, %v1365, %v1361
        %v1423 = vsel %vm698, %v1369, %v1422
        %v1424 = vsel %vm700, %v1373, %v1423
        %v1425 = vsel %vm702, %v1377, %v1424
        %v1426 = vsel %vm704, %v1381, %v1425
        %v1427 = vsel %vm706, %v1385, %v1426
        %v1428 = vsel %vm708, %v1389, %v1427
        %v1429 = vsel %vm696, %v1397, %v1393
        %v1430 = vsel %vm698, %v1401, %v1429
        %v1431 = vsel %vm700, %v1405, %v1430
        %v1432 = vsel %vm702, %v1409, %v1431
        %v1433 = vsel %vm704, %v1413, %v1432
        %v1434 = vsel %vm706, %v1417, %v1433
        %v1435 = vsel %vm708, %v1421, %v1434
        %v1438 = vadd.f32 %v1324, %v1428
        %v1439 = vadd.f32 %v1325, %v1435
        %v1440 = vlaneseq
        %v1441 = vshrl.u32 %v1440, 7
        %v1442 = vsub.s32 0, %v1441
        %v1443 = vrot.slane %v1438, %v1442
        %1445 = vbcast.lane.b32.xlu0 %v1443, 256
        %v1446 = vpop.permute.xlu0 %1445
        %v1447 = vlaneseq
        %v1448 = vshrl.u32 %v1447, 7
        %v1449 = vsub.s32 1, %v1448
        %v1450 = vrot.slane %v1438, %v1449
        %1452 = vbcast.lane.b32.xlu0 %v1450, 256
        %v1453 = vpop.permute.xlu0 %1452
        %v1454 = vlaneseq
        %v1455 = vshrl.u32 %v1454, 7
        %v1456 = vsub.s32 2, %v1455
        %v1457 = vrot.slane %v1438, %v1456
        %1459 = vbcast.lane.b32.xlu0 %v1457, 256
        %v1460 = vpop.permute.xlu0 %1459
        %v1461 = vlaneseq
        %v1462 = vshrl.u32 %v1461, 7
        %v1463 = vsub.s32 3, %v1462
        %v1464 = vrot.slane %v1438, %v1463
        %1466 = vbcast.lane.b32.xlu0 %v1464, 256
        %v1467 = vpop.permute.xlu0 %1466
        %v1468 = vlaneseq
        %v1469 = vshrl.u32 %v1468, 7
        %v1470 = vsub.s32 4, %v1469
        %v1471 = vrot.slane %v1438, %v1470
        %1473 = vbcast.lane.b32.xlu0 %v1471, 256
        %v1474 = vpop.permute.xlu0 %1473
        %v1475 = vlaneseq
        %v1476 = vshrl.u32 %v1475, 7
        %v1477 = vsub.s32 5, %v1476
        %v1478 = vrot.slane %v1438, %v1477
        %1480 = vbcast.lane.b32.xlu0 %v1478, 256
        %v1481 = vpop.permute.xlu0 %1480
        %v1482 = vlaneseq
        %v1483 = vshrl.u32 %v1482, 7
        %v1484 = vsub.s32 6, %v1483
        %v1485 = vrot.slane %v1438, %v1484
        %1487 = vbcast.lane.b32.xlu0 %v1485, 256
        %v1488 = vpop.permute.xlu0 %1487
        %v1489 = vlaneseq
        %v1490 = vshrl.u32 %v1489, 7
        %v1491 = vsub.s32 7, %v1490
        %v1492 = vrot.slane %v1438, %v1491
        %1494 = vbcast.lane.b32.xlu0 %v1492, 256
        %v1495 = vpop.permute.xlu0 %1494
        %v1496 = vlaneseq
        %v1497 = vshrl.u32 %v1496, 7
        %v1498 = vsub.s32 0, %v1497
        %v1499 = vrot.slane %v1439, %v1498
        %1501 = vbcast.lane.b32.xlu0 %v1499, 256
        %v1502 = vpop.permute.xlu0 %1501
        %v1503 = vlaneseq
        %v1504 = vshrl.u32 %v1503, 7
        %v1505 = vsub.s32 1, %v1504
        %v1506 = vrot.slane %v1439, %v1505
        %1508 = vbcast.lane.b32.xlu0 %v1506, 256
        %v1509 = vpop.permute.xlu0 %1508
        %v1510 = vlaneseq
        %v1511 = vshrl.u32 %v1510, 7
        %v1512 = vsub.s32 2, %v1511
        %v1513 = vrot.slane %v1439, %v1512
        %1515 = vbcast.lane.b32.xlu0 %v1513, 256
        %v1516 = vpop.permute.xlu0 %1515
        %v1517 = vlaneseq
        %v1518 = vshrl.u32 %v1517, 7
        %v1519 = vsub.s32 3, %v1518
        %v1520 = vrot.slane %v1439, %v1519
        %1522 = vbcast.lane.b32.xlu0 %v1520, 256
        %v1523 = vpop.permute.xlu0 %1522
        %v1524 = vlaneseq
        %v1525 = vshrl.u32 %v1524, 7
        %v1526 = vsub.s32 4, %v1525
        %v1527 = vrot.slane %v1439, %v1526
        %1529 = vbcast.lane.b32.xlu0 %v1527, 256
        %v1530 = vpop.permute.xlu0 %1529
        %v1531 = vlaneseq
        %v1532 = vshrl.u32 %v1531, 7
        %v1533 = vsub.s32 5, %v1532
        %v1534 = vrot.slane %v1439, %v1533
        %1536 = vbcast.lane.b32.xlu0 %v1534, 256
        %v1537 = vpop.permute.xlu0 %1536
        %v1538 = vlaneseq
        %v1539 = vshrl.u32 %v1538, 7
        %v1540 = vsub.s32 6, %v1539
        %v1541 = vrot.slane %v1439, %v1540
        %1543 = vbcast.lane.b32.xlu0 %v1541, 256
        %v1544 = vpop.permute.xlu0 %1543
        %v1545 = vlaneseq
        %v1546 = vshrl.u32 %v1545, 7
        %v1547 = vsub.s32 7, %v1546
        %v1548 = vrot.slane %v1439, %v1547
        %1550 = vbcast.lane.b32.xlu0 %v1548, 256
        %v1551 = vpop.permute.xlu0 %1550
        %v1552 = vmul.f32 %v1321, 0.25
        %v1553 = vmul.f32 %v1322, 0.25
        %v1554 = vmul.f32 %v1323, 0.25
        %v1558 = vlaneseq
        %v1559 = vshrl.u32 %v1558, 7
        %v1560 = vsub.s32 1, %v1559
        %v1561 = vrot.slane %v1552, %v1560
        %1563 = vbcast.lane.b32.xlu0 %v1561, 256
        %v1564 = vpop.permute.xlu0 %1563
        %v1565 = vlaneseq
        %v1566 = vshrl.u32 %v1565, 7
        %v1567 = vsub.s32 2, %v1566
        %v1568 = vrot.slane %v1552, %v1567
        %1570 = vbcast.lane.b32.xlu0 %v1568, 256
        %v1571 = vpop.permute.xlu0 %1570
        %v1572 = vlaneseq
        %v1573 = vshrl.u32 %v1572, 7
        %v1574 = vsub.s32 3, %v1573
        %v1575 = vrot.slane %v1552, %v1574
        %1577 = vbcast.lane.b32.xlu0 %v1575, 256
        %v1578 = vpop.permute.xlu0 %1577
        %v1579 = vlaneseq
        %v1580 = vshrl.u32 %v1579, 7
        %v1581 = vsub.s32 4, %v1580
        %v1582 = vrot.slane %v1552, %v1581
        %1584 = vbcast.lane.b32.xlu0 %v1582, 256
        %v1585 = vpop.permute.xlu0 %1584
        %v1586 = vlaneseq
        %v1587 = vshrl.u32 %v1586, 7
        %v1588 = vsub.s32 5, %v1587
        %v1589 = vrot.slane %v1552, %v1588
        %1591 = vbcast.lane.b32.xlu0 %v1589, 256
        %v1592 = vpop.permute.xlu0 %1591
        %v1593 = vlaneseq
        %v1594 = vshrl.u32 %v1593, 7
        %v1595 = vsub.s32 6, %v1594
        %v1596 = vrot.slane %v1552, %v1595
        %1598 = vbcast.lane.b32.xlu0 %v1596, 256
        %v1599 = vpop.permute.xlu0 %1598
        %v1600 = vlaneseq
        %v1601 = vshrl.u32 %v1600, 7
        %v1602 = vsub.s32 7, %v1601
        %v1603 = vrot.slane %v1552, %v1602
        %1605 = vbcast.lane.b32.xlu0 %v1603, 256
        %v1606 = vpop.permute.xlu0 %1605
        %v1607 = vlaneseq
        %v1608 = vshrl.u32 %v1607, 7
        %v1609 = vsub.s32 0, %v1608
        %v1610 = vrot.slane %v1553, %v1609
        %1612 = vbcast.lane.b32.xlu0 %v1610, 256
        %v1613 = vpop.permute.xlu0 %1612
        %v1614 = vlaneseq
        %v1615 = vshrl.u32 %v1614, 7
        %v1616 = vsub.s32 1, %v1615
        %v1617 = vrot.slane %v1553, %v1616
        %1619 = vbcast.lane.b32.xlu0 %v1617, 256
        %v1620 = vpop.permute.xlu0 %1619
        %v1621 = vlaneseq
        %v1622 = vshrl.u32 %v1621, 7
        %v1623 = vsub.s32 2, %v1622
        %v1624 = vrot.slane %v1553, %v1623
        %1626 = vbcast.lane.b32.xlu0 %v1624, 256
        %v1627 = vpop.permute.xlu0 %1626
        %v1628 = vlaneseq
        %v1629 = vshrl.u32 %v1628, 7
        %v1630 = vsub.s32 3, %v1629
        %v1631 = vrot.slane %v1553, %v1630
        %1633 = vbcast.lane.b32.xlu0 %v1631, 256
        %v1634 = vpop.permute.xlu0 %1633
        %v1635 = vlaneseq
        %v1636 = vshrl.u32 %v1635, 7
        %v1637 = vsub.s32 4, %v1636
        %v1638 = vrot.slane %v1553, %v1637
        %1640 = vbcast.lane.b32.xlu0 %v1638, 256
        %v1641 = vpop.permute.xlu0 %1640
        %v1642 = vlaneseq
        %v1643 = vshrl.u32 %v1642, 7
        %v1644 = vsub.s32 5, %v1643
        %v1645 = vrot.slane %v1553, %v1644
        %1647 = vbcast.lane.b32.xlu0 %v1645, 256
        %v1648 = vpop.permute.xlu0 %1647
        %v1649 = vlaneseq
        %v1650 = vshrl.u32 %v1649, 7
        %v1651 = vsub.s32 6, %v1650
        %v1652 = vrot.slane %v1553, %v1651
        %1654 = vbcast.lane.b32.xlu0 %v1652, 256
        %v1655 = vpop.permute.xlu0 %1654
        %v1656 = vlaneseq
        %v1657 = vshrl.u32 %v1656, 7
        %v1658 = vsub.s32 7, %v1657
        %v1659 = vrot.slane %v1553, %v1658
        %1661 = vbcast.lane.b32.xlu0 %v1659, 256
        %v1662 = vpop.permute.xlu0 %1661
        %v1663 = vlaneseq
        %v1664 = vshrl.u32 %v1663, 7
        %v1665 = vsub.s32 0, %v1664
        %v1666 = vrot.slane %v1554, %v1665
        %1668 = vbcast.lane.b32.xlu0 %v1666, 256
        %v1669 = vpop.permute.xlu0 %1668
        %v1686 = vadd.f32 %v1326, %v1564
        %v1687 = vadd.f32 %v1327, %v1571
        %v1688 = vadd.f32 %v1328, %v1578
        %v1689 = vadd.f32 %v1329, %v1585
        %v1690 = vadd.f32 %v1330, %v1592
        %v1691 = vadd.f32 %v1331, %v1599
        %v1692 = vadd.f32 %v1332, %v1606
        %v1693 = vadd.f32 %v1333, %v1613
        %v1694 = vadd.f32 %v1334, %v1620
        %v1695 = vadd.f32 %v1335, %v1627
        %v1696 = vadd.f32 %v1336, %v1634
        %v1697 = vadd.f32 %v1337, %v1641
        %v1698 = vadd.f32 %v1338, %v1648
        %v1699 = vadd.f32 %v1339, %v1655
        %v1700 = vadd.f32 %v1340, %v1662
        %v1701 = vadd.f32 %v1341, %v1669
        %1718 = vrot.lane.b32.xlu0 %v1686, 1
        %v1719 = vpop.permute.xlu0 %1718
        %1720 = vrot.lane.b32.xlu0 %v1687, 1
        %v1721 = vpop.permute.xlu0 %1720
        %1722 = vrot.lane.b32.xlu0 %v1688, 1
        %v1723 = vpop.permute.xlu0 %1722
        %1724 = vrot.lane.b32.xlu0 %v1689, 1
        %v1725 = vpop.permute.xlu0 %1724
        %1726 = vrot.lane.b32.xlu0 %v1690, 1
        %v1727 = vpop.permute.xlu0 %1726
        %1728 = vrot.lane.b32.xlu0 %v1691, 1
        %v1729 = vpop.permute.xlu0 %1728
        %1730 = vrot.lane.b32.xlu0 %v1692, 1
        %v1731 = vpop.permute.xlu0 %1730
        %1732 = vrot.lane.b32.xlu0 %v1693, 1
        %v1733 = vpop.permute.xlu0 %1732
        %1734 = vrot.lane.b32.xlu0 %v1694, 1
        %v1735 = vpop.permute.xlu0 %1734
        %1736 = vrot.lane.b32.xlu0 %v1695, 1
        %v1737 = vpop.permute.xlu0 %1736
        %1738 = vrot.lane.b32.xlu0 %v1696, 1
        %v1739 = vpop.permute.xlu0 %1738
        %1740 = vrot.lane.b32.xlu0 %v1697, 1
        %v1741 = vpop.permute.xlu0 %1740
        %1742 = vrot.lane.b32.xlu0 %v1698, 1
        %v1743 = vpop.permute.xlu0 %1742
        %1744 = vrot.lane.b32.xlu0 %v1699, 1
        %v1745 = vpop.permute.xlu0 %1744
        %1746 = vrot.lane.b32.xlu0 %v1700, 1
        %v1747 = vpop.permute.xlu0 %1746
        %1748 = vrot.lane.b32.xlu0 %v1701, 1
        %v1749 = vpop.permute.xlu0 %1748
        %v1766 = vsel %vm380, %v1446, %v1719
        %v1767 = vsel %vm380, %v1453, %v1721
        %v1768 = vsel %vm380, %v1460, %v1723
        %v1769 = vsel %vm380, %v1467, %v1725
        %v1770 = vsel %vm380, %v1474, %v1727
        %v1771 = vsel %vm380, %v1481, %v1729
        %v1772 = vsel %vm380, %v1488, %v1731
        %v1773 = vsel %vm380, %v1495, %v1733
        %v1774 = vsel %vm380, %v1502, %v1735
        %v1775 = vsel %vm380, %v1509, %v1737
        %v1776 = vsel %vm380, %v1516, %v1739
        %v1777 = vsel %vm380, %v1523, %v1741
        %v1778 = vsel %vm380, %v1530, %v1743
        %v1779 = vsel %vm380, %v1537, %v1745
        %v1780 = vsel %vm380, %v1544, %v1747
        %v1781 = vsel %vm380, %v1551, %v1749
        %v1782 = vcombine.low %v1766, %v1768
        %v1784 = vunpack.c.l.s4 1983009808
        %v1785 = vunpack.c.0.s8 %v1784
        %v1786 = vlaneseq
        %v1787 = vshrl.u32 %v1786, 7
        %v1788 = vsub.s32 %v1785, %v1787
        %v1789 = vrot.slane %v1782, %v1788
        %v1790 = vcombine.low %v1767, %v1769
        %v1792 = vunpack.c.l.s4 1983009808
        %v1793 = vunpack.c.0.s8 %v1792
        %v1794 = vlaneseq
        %v1795 = vshrl.u32 %v1794, 7
        %v1796 = vsub.s32 %v1793, %v1795
        %v1797 = vrot.slane %v1790, %v1796
        %v1798 = vcombine.low %v1770, %v1772
        %v1800 = vunpack.c.l.s4 1983009808
        %v1801 = vunpack.c.0.s8 %v1800
        %v1802 = vlaneseq
        %v1803 = vshrl.u32 %v1802, 7
        %v1804 = vsub.s32 %v1801, %v1803
        %v1805 = vrot.slane %v1798, %v1804
        %v1806 = vcombine.low %v1771, %v1773
        %v1808 = vunpack.c.l.s4 1983009808
        %v1809 = vunpack.c.0.s8 %v1808
        %v1810 = vlaneseq
        %v1811 = vshrl.u32 %v1810, 7
        %v1812 = vsub.s32 %v1809, %v1811
        %v1813 = vrot.slane %v1806, %v1812
        %v1814 = vcombine.low %v1789, %v1797
        %v1815 = vcombine.high %v1789, %v1797
        %v1817 = vunpack.c.l.s4 1934713408
        %v1818 = vunpack.c.0.s8 %v1817
        %v1819 = vlaneseq
        %v1820 = vshrl.u32 %v1819, 7
        %v1821 = vsub.s32 %v1818, %v1820
        %v1822 = vrot.slane %v1814, %v1821
        %v1824 = vunpack.c.l.s4 1934713408
        %v1825 = vunpack.c.0.s8 %v1824
        %v1826 = vlaneseq
        %v1827 = vshrl.u32 %v1826, 7
        %v1828 = vsub.s32 %v1825, %v1827
        %v1829 = vrot.slane %v1815, %v1828
        %v1830 = vcombine.low %v1805, %v1813
        %v1831 = vcombine.high %v1805, %v1813
        %v1833 = vunpack.c.l.s4 1934713408
        %v1834 = vunpack.c.0.s8 %v1833
        %v1835 = vlaneseq
        %v1836 = vshrl.u32 %v1835, 7
        %v1837 = vsub.s32 %v1834, %v1836
        %v1838 = vrot.slane %v1830, %v1837
        %v1840 = vunpack.c.l.s4 1934713408
        %v1841 = vunpack.c.0.s8 %v1840
        %v1842 = vlaneseq
        %v1843 = vshrl.u32 %v1842, 7
        %v1844 = vsub.s32 %v1841, %v1843
        %v1845 = vrot.slane %v1831, %v1844
        %v1846 = vcombine.low %v1822, %v1838
        %v1847 = vcombine.high %v1822, %v1838
        %v1848 = vcombine.low %v1829, %v1845
        %v1849 = vcombine.high %v1829, %v1845
        %v1850 = vcombine.low %v1774, %v1776
        %v1852 = vunpack.c.l.s4 1983009808
        %v1853 = vunpack.c.0.s8 %v1852
        %v1854 = vlaneseq
        %v1855 = vshrl.u32 %v1854, 7
        %v1856 = vsub.s32 %v1853, %v1855
        %v1857 = vrot.slane %v1850, %v1856
        %v1858 = vcombine.low %v1775, %v1777
        %v1860 = vunpack.c.l.s4 1983009808
        %v1861 = vunpack.c.0.s8 %v1860
        %v1862 = vlaneseq
        %v1863 = vshrl.u32 %v1862, 7
        %v1864 = vsub.s32 %v1861, %v1863
        %v1865 = vrot.slane %v1858, %v1864
        %v1866 = vcombine.low %v1778, %v1780
        %v1868 = vunpack.c.l.s4 1983009808
        %v1869 = vunpack.c.0.s8 %v1868
        %v1870 = vlaneseq
        %v1871 = vshrl.u32 %v1870, 7
        %v1872 = vsub.s32 %v1869, %v1871
        %v1873 = vrot.slane %v1866, %v1872
        %v1874 = vcombine.low %v1779, %v1781
        %v1876 = vunpack.c.l.s4 1983009808
        %v1877 = vunpack.c.0.s8 %v1876
        %v1878 = vlaneseq
        %v1879 = vshrl.u32 %v1878, 7
        %v1880 = vsub.s32 %v1877, %v1879
        %v1881 = vrot.slane %v1874, %v1880
        %v1882 = vcombine.low %v1857, %v1865
        %v1883 = vcombine.high %v1857, %v1865
        %v1885 = vunpack.c.l.s4 1934713408
        %v1886 = vunpack.c.0.s8 %v1885
        %v1887 = vlaneseq
        %v1888 = vshrl.u32 %v1887, 7
        %v1889 = vsub.s32 %v1886, %v1888
        %v1890 = vrot.slane %v1882, %v1889
        %v1892 = vunpack.c.l.s4 1934713408
        %v1893 = vunpack.c.0.s8 %v1892
        %v1894 = vlaneseq
        %v1895 = vshrl.u32 %v1894, 7
        %v1896 = vsub.s32 %v1893, %v1895
        %v1897 = vrot.slane %v1883, %v1896
        %v1898 = vcombine.low %v1873, %v1881
        %v1899 = vcombine.high %v1873, %v1881
        %v1901 = vunpack.c.l.s4 1934713408
        %v1902 = vunpack.c.0.s8 %v1901
        %v1903 = vlaneseq
        %v1904 = vshrl.u32 %v1903, 7
        %v1905 = vsub.s32 %v1902, %v1904
        %v1906 = vrot.slane %v1898, %v1905
        %v1908 = vunpack.c.l.s4 1934713408
        %v1909 = vunpack.c.0.s8 %v1908
        %v1910 = vlaneseq
        %v1911 = vshrl.u32 %v1910, 7
        %v1912 = vsub.s32 %v1909, %v1911
        %v1913 = vrot.slane %v1899, %v1912
        %v1914 = vcombine.low %v1890, %v1906
        %v1915 = vcombine.high %v1890, %v1906
        %v1916 = vcombine.low %v1897, %v1913
        %v1917 = vcombine.high %v1897, %v1913
        %1920 = vrot.lane.b32.xlu0 %v1847, 2
        %v1921 = vpop.permute.xlu0 %1920
        %1922 = vrot.lane.b32.xlu0 %v1915, 2
        %v1923 = vpop.permute.xlu0 %1922
        %1928 = vrot.lane.b32.xlu0 %v1848, 4
        %v1929 = vpop.permute.xlu0 %1928
        %1930 = vrot.lane.b32.xlu0 %v1916, 4
        %v1931 = vpop.permute.xlu0 %1930
        %1936 = vrot.lane.b32.xlu0 %v1849, 6
        %v1937 = vpop.permute.xlu0 %1936
        %1938 = vrot.lane.b32.xlu0 %v1917, 6
        %v1939 = vpop.permute.xlu0 %1938
        %v1942 = vsel %vm612, %v1846, %v1921
        %v1943 = vsel %vm612, %v1914, %v1923
        %v1944 = vsel %vm1094, %v1942, %v1929
        %v1945 = vsel %vm1094, %v1943, %v1931
        %vm1946 = vcmask 48128
        %v1947 = vsel %vm1946, %v1944, %v1937
        %v1948 = vsel %vm1946, %v1945, %v1939
        %v1949 = vpack.c.bf16 %v1948, %v1947
        %1951 = vrot.lane.b32.xlu0 %v1949, 1
        %v1952 = vpop.permute.xlu0 %1951
        %v1954 = vsel %vm380, 0, %v1952
        %v1955 = vsel %vm713, %v1954, 0
        %1958 = vrot.lane.b32.xlu0 %v1955, 127
        %v1959 = vpop.permute.xlu0 %1958
        %1961 = vrot.lane.b32.xlu0 %v1955, 126
        %v1962 = vpop.permute.xlu0 %1961
        %v1964 = vld [vmem:[%s5] sm:$0xf]
        %v1965 = vld [vmem:[%s6] sm:$0xff]
        %1967 = vset.pattern.permute.xlu0 0
        %1968 = vperm.xlu0 %1967, %v1965
        %v1969 = vpop.permute.xlu0 %1968
        %vm1971 = vcmask 392192
        %v1973 = vsel %vm1971, %v1964, 0
        %1975 = vmatprep.subr.bf16.mxu0 0
        %1976 = vmatpush1.bf16.msra.mxu0 %v1955
        %1977 = vmatprep.subr.bf16.mxu0 0
        %1978 = vmatpush1.bf16.msra.mxu0 %v1959
        %1979 = vmatprep.subr.bf16.mxu0 0
        %1980 = vmatpush1.bf16.msra.mxu0 %v1962
        %1981 = vmatprep.subr.bf16.mxu0 0
        %1982 = vmatpush1.bf16.msra.mxu0 0
        %1983 = vmatprep.subr.bf16.mxu0 0
        %1984 = vmatpush1.bf16.msra.mxu0 0
        %1985 = vmatprep.subr.bf16.mxu0 0
        %1986 = vmatpush1.bf16.msra.mxu0 0
        %1987 = vmatprep.subr.bf16.mxu0 0
        %1988 = vmatpush1.bf16.msra.mxu0 0
        %1989 = vmatprep.subr.bf16.mxu0 0
        %1990 = vmatpush1.bf16.msra.mxu0 0
        %1991 = vmatprep.subr.bf16.mxu0 0
        %1992 = vmatpush1.bf16.msra.mxu0 0
        %1993 = vmatprep.subr.bf16.mxu0 0
        %1994 = vmatpush1.bf16.msra.mxu0 0
        %1995 = vmatprep.subr.bf16.mxu0 0
        %1996 = vmatpush1.bf16.msra.mxu0 0
        %1997 = vmatprep.subr.bf16.mxu0 0
        %1998 = vmatpush1.bf16.msra.mxu0 0
        %1999 = vmatprep.subr.bf16.mxu0 0
        %2000 = vmatpush1.bf16.msra.mxu0 0
        %2001 = vmatprep.subr.bf16.mxu0 0
        %2002 = vmatpush1.bf16.msra.mxu0 0
        %2003 = vmatprep.subr.bf16.mxu0 0
        %2004 = vmatpush1.bf16.msra.mxu0 0
        %2005 = vmatprep.subr.bf16.mxu0 0
        %2006 = vmatpush1.bf16.msra.mxu0 0
        %2007 = vmatprep.mubr.bf16.mxu0 0
        %2008 = vmatmul.mubr.bf16.gmra.mrb[0].mxu0 %v1973
        %v2009 = vpop.f32.mrb[0].mxu0
        %v2010 = vadd.f32 %v1969, %v2009
        %v2011 = vpop.f32.mrb[0].mxu0
        %v2012 = vpop.f32.mrb[0].mxu0
        %v2013 = vpop.f32.mrb[0].mxu0
        %2014 = vdwg.mxu0
        %v2015 = vmax.f32 %v2010, 0.0
        %2017 = vrot.lane.b32.xlu0 %v2015, 1
        %v2018 = vpop.permute.xlu0 %2017
        %v2020 = vsel %vm380, %v2015, %v2018
        %2021 = vrot.lane.b32.xlu0 %v2015, 127
        %v2022 = vpop.permute.xlu0 %2021
        %vm2024 = vcmask 56320
        %v2025 = vsel %vm2024, %v2022, %v2015
        %v2026 = vmul.f32 %v2020, 0.25
        %v2027 = vmul.f32 %v2015, 0.75
        %v2028 = vadd.f32 %v2026, %v2027
        %v2029 = vlaneseq
        %v2030 = vshrl.u32 %v2029, 7
        %v2031 = vsub.s32 0, %v2030
        %v2032 = vrot.slane %v2028, %v2031
        %2034 = vbcast.lane.b32.xlu0 %v2032, 256
        %v2035 = vpop.permute.xlu0 %2034
        %v2036 = vlaneseq
        %v2037 = vshrl.u32 %v2036, 7
        %v2038 = vsub.s32 1, %v2037
        %v2039 = vrot.slane %v2028, %v2038
        %2041 = vbcast.lane.b32.xlu0 %v2039, 256
        %v2042 = vpop.permute.xlu0 %2041
        %v2043 = vlaneseq
        %v2044 = vshrl.u32 %v2043, 7
        %v2045 = vsub.s32 2, %v2044
        %v2046 = vrot.slane %v2028, %v2045
        %2048 = vbcast.lane.b32.xlu0 %v2046, 256
        %v2049 = vpop.permute.xlu0 %2048
        %v2050 = vlaneseq
        %v2051 = vshrl.u32 %v2050, 7
        %v2052 = vsub.s32 3, %v2051
        %v2053 = vrot.slane %v2028, %v2052
        %2055 = vbcast.lane.b32.xlu0 %v2053, 256
        %v2056 = vpop.permute.xlu0 %2055
        %v2057 = vlaneseq
        %v2058 = vshrl.u32 %v2057, 7
        %v2059 = vsub.s32 4, %v2058
        %v2060 = vrot.slane %v2028, %v2059
        %2062 = vbcast.lane.b32.xlu0 %v2060, 256
        %v2063 = vpop.permute.xlu0 %2062
        %v2064 = vlaneseq
        %v2065 = vshrl.u32 %v2064, 7
        %v2066 = vsub.s32 5, %v2065
        %v2067 = vrot.slane %v2028, %v2066
        %2069 = vbcast.lane.b32.xlu0 %v2067, 256
        %v2070 = vpop.permute.xlu0 %2069
        %v2071 = vlaneseq
        %v2072 = vshrl.u32 %v2071, 7
        %v2073 = vsub.s32 6, %v2072
        %v2074 = vrot.slane %v2028, %v2073
        %2076 = vbcast.lane.b32.xlu0 %v2074, 256
        %v2077 = vpop.permute.xlu0 %2076
        %v2078 = vlaneseq
        %v2079 = vshrl.u32 %v2078, 7
        %v2080 = vsub.s32 7, %v2079
        %v2081 = vrot.slane %v2028, %v2080
        %2083 = vbcast.lane.b32.xlu0 %v2081, 256
        %v2084 = vpop.permute.xlu0 %2083
        %v2085 = vmul.f32 %v2025, 0.25
        %v2086 = vadd.f32 %v2027, %v2085
        %v2087 = vlaneseq
        %v2088 = vshrl.u32 %v2087, 7
        %v2089 = vsub.s32 0, %v2088
        %v2090 = vrot.slane %v2086, %v2089
        %2092 = vbcast.lane.b32.xlu0 %v2090, 256
        %v2093 = vpop.permute.xlu0 %2092
        %v2094 = vlaneseq
        %v2095 = vshrl.u32 %v2094, 7
        %v2096 = vsub.s32 1, %v2095
        %v2097 = vrot.slane %v2086, %v2096
        %2099 = vbcast.lane.b32.xlu0 %v2097, 256
        %v2100 = vpop.permute.xlu0 %2099
        %v2101 = vlaneseq
        %v2102 = vshrl.u32 %v2101, 7
        %v2103 = vsub.s32 2, %v2102
        %v2104 = vrot.slane %v2086, %v2103
        %2106 = vbcast.lane.b32.xlu0 %v2104, 256
        %v2107 = vpop.permute.xlu0 %2106
        %v2108 = vlaneseq
        %v2109 = vshrl.u32 %v2108, 7
        %v2110 = vsub.s32 3, %v2109
        %v2111 = vrot.slane %v2086, %v2110
        %2113 = vbcast.lane.b32.xlu0 %v2111, 256
        %v2114 = vpop.permute.xlu0 %2113
        %v2115 = vlaneseq
        %v2116 = vshrl.u32 %v2115, 7
        %v2117 = vsub.s32 4, %v2116
        %v2118 = vrot.slane %v2086, %v2117
        %2120 = vbcast.lane.b32.xlu0 %v2118, 256
        %v2121 = vpop.permute.xlu0 %2120
        %v2122 = vlaneseq
        %v2123 = vshrl.u32 %v2122, 7
        %v2124 = vsub.s32 5, %v2123
        %v2125 = vrot.slane %v2086, %v2124
        %2127 = vbcast.lane.b32.xlu0 %v2125, 256
        %v2128 = vpop.permute.xlu0 %2127
        %v2129 = vlaneseq
        %v2130 = vshrl.u32 %v2129, 7
        %v2131 = vsub.s32 6, %v2130
        %v2132 = vrot.slane %v2086, %v2131
        %2134 = vbcast.lane.b32.xlu0 %v2132, 256
        %v2135 = vpop.permute.xlu0 %2134
        %v2136 = vlaneseq
        %v2137 = vshrl.u32 %v2136, 7
        %v2138 = vsub.s32 7, %v2137
        %v2139 = vrot.slane %v2086, %v2138
        %2141 = vbcast.lane.b32.xlu0 %v2139, 256
        %v2142 = vpop.permute.xlu0 %2141
        %v2143 = vsel %vm380, %v2035, %v2093
        %v2144 = vsel %vm380, %v2042, %v2100
        %v2145 = vsel %vm380, %v2049, %v2107
        %v2146 = vsel %vm380, %v2056, %v2114
        %v2147 = vsel %vm380, %v2063, %v2121
        %v2148 = vsel %vm380, %v2070, %v2128
        %v2149 = vsel %vm380, %v2077, %v2135
        %v2150 = vsel %vm380, %v2084, %v2142
        %v2151 = vcombine.low %v2143, %v2145
        %v2152 = vcombine.high %v2143, %v2145
        %v2154 = vunpack.c.l.s4 1983009808
        %v2155 = vunpack.c.0.s8 %v2154
        %v2156 = vlaneseq
        %v2157 = vshrl.u32 %v2156, 7
        %v2158 = vsub.s32 %v2155, %v2157
        %v2159 = vrot.slane %v2151, %v2158
        %v2161 = vunpack.c.l.s4 1983009808
        %v2162 = vunpack.c.0.s8 %v2161
        %v2163 = vlaneseq
        %v2164 = vshrl.u32 %v2163, 7
        %v2165 = vsub.s32 %v2162, %v2164
        %v2166 = vrot.slane %v2152, %v2165
        %v2167 = vcombine.low %v2144, %v2146
        %v2168 = vcombine.high %v2144, %v2146
        %v2170 = vunpack.c.l.s4 1983009808
        %v2171 = vunpack.c.0.s8 %v2170
        %v2172 = vlaneseq
        %v2173 = vshrl.u32 %v2172, 7
        %v2174 = vsub.s32 %v2171, %v2173
        %v2175 = vrot.slane %v2167, %v2174
        %v2177 = vunpack.c.l.s4 1983009808
        %v2178 = vunpack.c.0.s8 %v2177
        %v2179 = vlaneseq
        %v2180 = vshrl.u32 %v2179, 7
        %v2181 = vsub.s32 %v2178, %v2180
        %v2182 = vrot.slane %v2168, %v2181
        %v2183 = vcombine.low %v2147, %v2149
        %v2184 = vcombine.high %v2147, %v2149
        %v2186 = vunpack.c.l.s4 1983009808
        %v2187 = vunpack.c.0.s8 %v2186
        %v2188 = vlaneseq
        %v2189 = vshrl.u32 %v2188, 7
        %v2190 = vsub.s32 %v2187, %v2189
        %v2191 = vrot.slane %v2183, %v2190
        %v2193 = vunpack.c.l.s4 1983009808
        %v2194 = vunpack.c.0.s8 %v2193
        %v2195 = vlaneseq
        %v2196 = vshrl.u32 %v2195, 7
        %v2197 = vsub.s32 %v2194, %v2196
        %v2198 = vrot.slane %v2184, %v2197
        %v2199 = vcombine.low %v2148, %v2150
        %v2200 = vcombine.high %v2148, %v2150
        %v2202 = vunpack.c.l.s4 1983009808
        %v2203 = vunpack.c.0.s8 %v2202
        %v2204 = vlaneseq
        %v2205 = vshrl.u32 %v2204, 7
        %v2206 = vsub.s32 %v2203, %v2205
        %v2207 = vrot.slane %v2199, %v2206
        %v2209 = vunpack.c.l.s4 1983009808
        %v2210 = vunpack.c.0.s8 %v2209
        %v2211 = vlaneseq
        %v2212 = vshrl.u32 %v2211, 7
        %v2213 = vsub.s32 %v2210, %v2212
        %v2214 = vrot.slane %v2200, %v2213
        %v2215 = vcombine.low %v2159, %v2175
        %v2216 = vcombine.high %v2159, %v2175
        %v2218 = vunpack.c.l.s4 1934713408
        %v2219 = vunpack.c.0.s8 %v2218
        %v2220 = vlaneseq
        %v2221 = vshrl.u32 %v2220, 7
        %v2222 = vsub.s32 %v2219, %v2221
        %v2223 = vrot.slane %v2215, %v2222
        %v2225 = vunpack.c.l.s4 1934713408
        %v2226 = vunpack.c.0.s8 %v2225
        %v2227 = vlaneseq
        %v2228 = vshrl.u32 %v2227, 7
        %v2229 = vsub.s32 %v2226, %v2228
        %v2230 = vrot.slane %v2216, %v2229
        %v2231 = vcombine.low %v2166, %v2182
        %v2232 = vcombine.high %v2166, %v2182
        %v2234 = vunpack.c.l.s4 1934713408
        %v2235 = vunpack.c.0.s8 %v2234
        %v2236 = vlaneseq
        %v2237 = vshrl.u32 %v2236, 7
        %v2238 = vsub.s32 %v2235, %v2237
        %v2239 = vrot.slane %v2231, %v2238
        %v2241 = vunpack.c.l.s4 1934713408
        %v2242 = vunpack.c.0.s8 %v2241
        %v2243 = vlaneseq
        %v2244 = vshrl.u32 %v2243, 7
        %v2245 = vsub.s32 %v2242, %v2244
        %v2246 = vrot.slane %v2232, %v2245
        %v2247 = vcombine.low %v2191, %v2207
        %v2248 = vcombine.high %v2191, %v2207
        %v2250 = vunpack.c.l.s4 1934713408
        %v2251 = vunpack.c.0.s8 %v2250
        %v2252 = vlaneseq
        %v2253 = vshrl.u32 %v2252, 7
        %v2254 = vsub.s32 %v2251, %v2253
        %v2255 = vrot.slane %v2247, %v2254
        %v2257 = vunpack.c.l.s4 1934713408
        %v2258 = vunpack.c.0.s8 %v2257
        %v2259 = vlaneseq
        %v2260 = vshrl.u32 %v2259, 7
        %v2261 = vsub.s32 %v2258, %v2260
        %v2262 = vrot.slane %v2248, %v2261
        %v2263 = vcombine.low %v2198, %v2214
        %v2264 = vcombine.high %v2198, %v2214
        %v2266 = vunpack.c.l.s4 1934713408
        %v2267 = vunpack.c.0.s8 %v2266
        %v2268 = vlaneseq
        %v2269 = vshrl.u32 %v2268, 7
        %v2270 = vsub.s32 %v2267, %v2269
        %v2271 = vrot.slane %v2263, %v2270
        %v2273 = vunpack.c.l.s4 1934713408
        %v2274 = vunpack.c.0.s8 %v2273
        %v2275 = vlaneseq
        %v2276 = vshrl.u32 %v2275, 7
        %v2277 = vsub.s32 %v2274, %v2276
        %v2278 = vrot.slane %v2264, %v2277
        %v2279 = vcombine.low %v2223, %v2255
        %v2280 = vcombine.high %v2223, %v2255
        %v2281 = vcombine.low %v2230, %v2262
        %v2282 = vcombine.high %v2230, %v2262
        %v2283 = vcombine.low %v2239, %v2271
        %v2284 = vcombine.high %v2239, %v2271
        %v2285 = vcombine.low %v2246, %v2278
        %v2286 = vcombine.high %v2246, %v2278
        %2288 = vrot.lane.b32.xlu0 %v2280, 2
        %v2289 = vpop.permute.xlu0 %2288
        %2292 = vrot.lane.b32.xlu0 %v2281, 4
        %v2293 = vpop.permute.xlu0 %2292
        %2296 = vrot.lane.b32.xlu0 %v2282, 6
        %v2297 = vpop.permute.xlu0 %2296
        %2300 = vrot.lane.b32.xlu0 %v2283, 8
        %v2301 = vpop.permute.xlu0 %2300
        %2304 = vrot.lane.b32.xlu0 %v2284, 10
        %v2305 = vpop.permute.xlu0 %2304
        %2308 = vrot.lane.b32.xlu0 %v2285, 12
        %v2309 = vpop.permute.xlu0 %2308
        %2312 = vrot.lane.b32.xlu0 %v2286, 14
        %v2313 = vpop.permute.xlu0 %2312
        %v2315 = vsel %vm612, %v2279, %v2289
        %v2316 = vsel %vm1094, %v2315, %v2293
        %v2317 = vsel %vm1946, %v2316, %v2297
        %vm2318 = vcmask 64512
        %v2319 = vsel %vm2318, %v2317, %v2301
        %vm2320 = vcmask 80896
        %v2321 = vsel %vm2320, %v2319, %v2305
        %v2322 = vsel %vm406, %v2321, %v2309
        %vm2323 = vcmask 113664
        %v2324 = vsel %vm2323, %v2322, %v2313
        %v2325 = vpack.c.bf16 %v2324, %v2324
        %2327 = vrot.lane.b32.xlu0 %v2325, 1
        %v2328 = vpop.permute.xlu0 %2327
        %v2330 = vsel %vm380, 0, %v2328
        %v2331 = vsel %vm384, %v2330, 0
        %v2333 = vrot.slane %v2331, 4
        %2334 = vrot.lane.b32.xlu0 %v2333, 127
        %v2335 = vpop.permute.xlu0 %2334
        %2336 = vrot.lane.b32.xlu0 %v2331, 126
        %v2337 = vpop.permute.xlu0 %2336
        %v2339 = vsel %vm396, %v2331, %v2335
        %v2341 = vld [vmem:[%s7] sm:$0x3]
        %v2342 = vld [vmem:[%s8] sm:$0xf]
        %2344 = vset.pattern.permute.xlu0 0
        %2345 = vperm.xlu0 %2344, %v2342
        %v2346 = vpop.permute.xlu0 %2345
        %v2349 = vsel %vm743, %v2341, 0
        %v2352 = vsel %vm396, %v2337, 0
        %2354 = vmatprep.subr.bf16.mxu0 0
        %2355 = vmatpush1.bf16.msra.mxu0 %v2339
        %2356 = vmatprep.subr.bf16.mxu0 0
        %2357 = vmatpush1.bf16.msra.mxu0 %v2352
        %2358 = vmatprep.subr.bf16.mxu0 0
        %2359 = vmatpush1.bf16.msra.mxu0 0
        %2360 = vmatprep.subr.bf16.mxu0 0
        %2361 = vmatpush1.bf16.msra.mxu0 0
        %2362 = vmatprep.subr.bf16.mxu0 0
        %2363 = vmatpush1.bf16.msra.mxu0 0
        %2364 = vmatprep.subr.bf16.mxu0 0
        %2365 = vmatpush1.bf16.msra.mxu0 0
        %2366 = vmatprep.subr.bf16.mxu0 0
        %2367 = vmatpush1.bf16.msra.mxu0 0
        %2368 = vmatprep.subr.bf16.mxu0 0
        %2369 = vmatpush1.bf16.msra.mxu0 0
        %2370 = vmatprep.subr.bf16.mxu0 0
        %2371 = vmatpush1.bf16.msra.mxu0 0
        %2372 = vmatprep.subr.bf16.mxu0 0
        %2373 = vmatpush1.bf16.msra.mxu0 0
        %2374 = vmatprep.subr.bf16.mxu0 0
        %2375 = vmatpush1.bf16.msra.mxu0 0
        %2376 = vmatprep.subr.bf16.mxu0 0
        %2377 = vmatpush1.bf16.msra.mxu0 0
        %2378 = vmatprep.subr.bf16.mxu0 0
        %2379 = vmatpush1.bf16.msra.mxu0 0
        %2380 = vmatprep.subr.bf16.mxu0 0
        %2381 = vmatpush1.bf16.msra.mxu0 0
        %2382 = vmatprep.subr.bf16.mxu0 0
        %2383 = vmatpush1.bf16.msra.mxu0 0
        %2384 = vmatprep.subr.bf16.mxu0 0
        %2385 = vmatpush1.bf16.msra.mxu0 0
        %2386 = vmatprep.mubr.bf16.mxu0 0
        %2387 = vmatmul.mubr.bf16.gmra.mrb[0].mxu0 %v2349
        %v2388 = vpop.f32.mrb[0].mxu0
        %v2389 = vadd.f32 %v2346, %v2388
        %v2390 = vpop.f32.mrb[0].mxu0
        %v2391 = vpop.f32.mrb[0].mxu0
        %v2392 = vpop.f32.mrb[0].mxu0
        %2393 = vdwg.mxu0
        %vm2394 = vcmask 125952
        %2395 = vst.msk [vmem:[%s358] sm:$0xf] %vm2394, %v2389
        %p2396 = scmp.lt.s32.totalorder %s25, 1
        %s2397 = scalar_select %p2396, %s25, 1
        %s2398 = smul.addr %s2397, 2
        %s2399 = smul.addr %s2398, 8
        %s2400 = scalar_lea.vmem %s9, %s2399
        %s2401 = sand.u32 %s253, 1
        %s2402 = scalar_lea.sflag [#allocation3], %s2401
        %s2403 = sand.u32 %s253, 1
        %s2404 = smul.addr %s2403, 4
        %s2405 = scalar_lea.vmem [#allocation2], %s2404
        // Predicated region
        $region57: #{conv_autoencoder_forward.1} parent=55 // pred_check
          %p2406 = pneg %p237
        $region58: #{conv_autoencoder_forward.1} parent=55 // pred_check_branch
          %2408 = sbr.rel (%p2406) target = $region60
        $region59: #{conv_autoencoder_forward.1} parent=55 // pred_region
          _
        $region60: #{conv_autoencoder_forward.1} parent=55 // pred_fallthru
          _
        // Predicated region
        $region61: #{conv_autoencoder_forward.1} parent=55 // pred_check
          %p2409 = pneg %p263
        $region62: #{conv_autoencoder_forward.1} parent=55 // pred_check_branch
          %2411 = sbr.rel (%p2409) target = $region64
        $region63: #{conv_autoencoder_forward.1} parent=55 // pred_region
          %s2413 = ssub.s32 64, 64
          %2414 = vsyncadd %s2402, %s2413
          %s2415 = smul.addr %s25, 64
          %s2416 = scalar_lea.hbm %s10, %s2415
          %s2418 = sshll.u32 %s2405, 4
          %s2419 = int_to_ptr.vmem [resolvable:$true] %s2418
          %2421 = dma.vmem_to_hbm [thread:$0]  %s2419, 64, %s2416, %s2402
        $region64: #{conv_autoencoder_forward.1} parent=55 // pred_fallthru
          _
      $region56: #{conv_autoencoder_forward.1} parent=5 // pred_fallthru
        _
      %p2422 = scmp.le.s32.totalorder 2, %s20
      // Predicated region
      $region65: #{conv_autoencoder_forward.1} parent=5 // pred_check
        %p2423 = pneg %p2422
      $region66: #{conv_autoencoder_forward.1} parent=5 // pred_check_branch
        %2425 = sbr.rel (%p2423) target = $region68
      $region67: #{conv_autoencoder_forward.1} parent=5 // pred_region
        %s2426 = ssub.s32 %s20, 2
        // Predicated region
        $region69: #{conv_autoencoder_forward.1} parent=67 // pred_check
          %p2427 = pneg %p243
        $region70: #{conv_autoencoder_forward.1} parent=67 // pred_check_branch
          %2429 = sbr.rel (%p2427) target = $region72
        $region71: #{conv_autoencoder_forward.1} parent=67 // pred_region
          %p2430 = scmp.lt.s32.totalorder %s26, 1
          %s2431 = scalar_select %p2430, %s26, 1
          %s2432 = smul.addr %s2431, 2
          %s2433 = smul.addr %s2432, 8
          %s2434 = scalar_lea.vmem %s9, %s2433
        $region72: #{conv_autoencoder_forward.1} parent=67 // pred_fallthru
          _
        // Predicated region
        $region73: #{conv_autoencoder_forward.1} parent=67 // pred_check
          %p2435 = pneg %p269
        $region74: #{conv_autoencoder_forward.1} parent=67 // pred_check_branch
          %2437 = sbr.rel (%p2435) target = $region76
        $region75: #{conv_autoencoder_forward.1} parent=67 // pred_region
          %s2438 = sand.u32 %s254, 1
          %s2439 = scalar_lea.sflag [#allocation3], %s2438
          %s2440 = sand.u32 %s254, 1
          %s2441 = smul.addr %s2440, 4
          %s2442 = scalar_lea.vmem [#allocation2], %s2441
          %2443 = dma.done %s2439, 64
        $region76: #{conv_autoencoder_forward.1} parent=67 // pred_fallthru
          _
      $region68: #{conv_autoencoder_forward.1} parent=5 // pred_fallthru
        _
    $region6: #{conv_autoencoder_forward.1} parent=1 // loop_footer
      %s24 = sadd.s32 1, %s20
    $region7: #{conv_autoencoder_forward.1} parent=1 // loop_footer_branch
      %19 = sbr.rel target = $region3
    $region8: #{conv_autoencoder_forward.1} parent=1 // loop_exit
      _
    %2444 = vsyncpa [#allocation3], 1
    %s2445 = scalar_lea.sflag [#allocation3], 1
    %2446 = vsyncpa %s2445, 1

</llo_original>
